<compile_context>
chip_gen: v7x
topology: tpu7x:2x2x1
jax: 0.10.0
libtpu: 0.0.40
codegen_flags: <defaults>
</compile_context>

<pallas_src>
import functools

import jax
import jax.numpy as jnp
from jax import lax
from jax.experimental import pallas as pl
from jax.experimental.pallas import tpu as pltpu


# --------------------------------------------------------------------------- #
# helpers
# --------------------------------------------------------------------------- #
def _round_up(x, m):
    return (x + m - 1) // m * m


def _pad2(a, row_pad, col_pad):
    if row_pad == 0 and col_pad == 0:
        return a
    return jnp.pad(a, ((0, row_pad), (0, col_pad)))


def _vmem_budget():
    """~70% of physical VMEM (never request the full 64 MiB on v7x)."""
    cap = 64 << 20
    try:
        info = pltpu.get_tpu_info()
        cap = int(getattr(info, "vmem_capacity_bytes", cap))
    except Exception:
        pass
    return int(0.70 * cap)


def _limit(est_bytes, budget):
    """Per-call scoped-VMEM limit: block estimate + headroom, capped at budget."""
    return int(min(budget, max(int(est_bytes) + (8 << 20), 32 << 20)))


def _pick_tile(fin_max, fp_max, budget):
    """Largest square adj tile whose heaviest call stays well inside the budget."""
    for t in (1024, 512, 256, 128):
        prep = 2 * (t * t * 4 + t * t * 2 + 2 * t * 4) + 2 * t * 4
        feat = 2 * (t * fin_max * 4 + fin_max * fp_max * 4 + t * 4 + t * fp_max * 2)
        layer = (2 * (t * t * 2 + 2 * t * fp_max * 2 + 2 * t * 4 + fp_max * 4
                      + t * fp_max * 4) + t * fp_max * 4)
        if max(prep, feat, layer) <= 0.55 * budget:
            return t
    return 128


# --------------------------------------------------------------------------- #
# kernels
# --------------------------------------------------------------------------- #
def _prep_kernel(adj_ref, adj_lo_ref, dinv_ref, slw_ref, rowsum_sc, diag_sc):
    """(tile, tile) streamed pass over f32 adj: degree + self-loop fill + bf16 cast.

    Grid = (row tiles, col tiles), col axis innermost.  rowsum / diag are
    accumulated in (tile, 1) scratch; the diagonal is extracted only from the
    diagonal block (i == k), not with full-row compares.
    """
    i = pl.program_id(0)
    k = pl.program_id(1)
    adj = adj_ref[...]                                   # (tile, tile) f32
    adj_lo_ref[...] = adj.astype(jnp.bfloat16)

    @pl.when(k == 0)
    def _():
        rowsum_sc[...] = jnp.zeros_like(rowsum_sc)
        diag_sc[...] = jnp.zeros_like(diag_sc)

    rowsum_sc[...] += jnp.sum(adj, axis=1, keepdims=True)

    @pl.when(i == k)  # square tiles -> the diagonal lives in block (i, i) only
    def _():
        tm, tk = adj.shape
        rows = lax.broadcasted_iota(jnp.int32, (tm, tk), 0)
        cols = lax.broadcasted_iota(jnp.int32, (tm, tk), 1)
        diag_sc[...] += jnp.sum(jnp.where(rows == cols, adj, 0.0),
                                axis=1, keepdims=True)

    @pl.when(k == pl.num_programs(1) - 1)
    def _():
        slw = jnp.where(diag_sc[...] != 0.0, 0.0, 1.0)   # add_remaining_self_loops
        deg = rowsum_sc[...] + slw                       # == rowsum(A_hat)
        dinv_ref[...] = jnp.where(deg > 0.0, lax.rsqrt(deg), 0.0)
        slw_ref[...] = slw


def _feat_kernel(h_ref, w_ref, dinv_ref, u_ref):
    """U = D^{-1/2} * (H @ W) for one row tile, computed once per layer (bf16 out)."""
    u = jnp.dot(h_ref[...], w_ref[...], preferred_element_type=jnp.float32)
    u_ref[...] = (dinv_ref[...] * u).astype(jnp.bfloat16)


def _layer_kernel(adj_ref, uk_ref, ut_ref, dinv_ref, slw_ref, b_ref, out_ref,
                  acc_sc, *, relu, inv_t, n_valid_cols):
    """Message passing for one (row tile, k tile): acc += adj_tile @ U_k.

    At the last k tile: add the self-loop term (row slice of U), apply the left
    D^{-1/2} scaling + bias, then ReLU or masked log-softmax.
    """
    k = pl.program_id(1)

    @pl.when(k == 0)
    def _():
        acc_sc[...] = jnp.zeros_like(acc_sc)

    acc_sc[...] += jnp.dot(adj_ref[...], uk_ref[...],
                           preferred_element_type=jnp.float32)

    @pl.when(k == pl.num_programs(1) - 1)
    def _():
        u_t = ut_ref[...].astype(jnp.float32)            # self-loop term (U row tile)
        out = dinv_ref[...] * (acc_sc[...] + slw_ref[...] * u_t) + b_ref[...]
        if relu:
            out_ref[...] = jnp.maximum(out, 0.0)
        else:
            # log_softmax(out / T, dim=1) with padded class lanes masked to -inf
            logits = out * inv_t
            cols = lax.broadcasted_iota(jnp.int32, logits.shape, 1)
            logits = jnp.where(cols < n_valid_cols, logits, -jnp.inf)
            m = jnp.max(logits, axis=1, keepdims=True)
            s = logits - m
            lse = jnp.log(jnp.sum(jnp.exp(s), axis=1, keepdims=True))
            out_ref[...] = s - lse


def _fused_small_kernel(adj_ref, x_ref, w1_ref, b1_ref, w2_ref, b2_ref, out_ref,
                        *, inv_t, n_class):
    """Small-N fast path: prep + both GCN layers + log-softmax with adj resident."""
    adj = adj_ref[...]
    n = adj.shape[0]
    rows = lax.broadcasted_iota(jnp.int32, (n, n), 0)
    cols = lax.broadcasted_iota(jnp.int32, (n, n), 1)
    diag = jnp.sum(jnp.where(rows == cols, adj, 0.0), axis=1, keepdims=True)
    slw = jnp.where(diag != 0.0, 0.0, 1.0)
    deg = jnp.sum(adj, axis=1, keepdims=True) + slw
    dinv = jnp.where(deg > 0.0, lax.rsqrt(deg), 0.0)
    adj_lo = adj.astype(jnp.bfloat16)

    def gcn_layer(h, w_ref, b_ref):
        u = dinv * jnp.dot(h, w_ref[...], preferred_element_type=jnp.float32)
        msg = jnp.dot(adj_lo, u.astype(jnp.bfloat16),
                      preferred_element_type=jnp.float32)
        return dinv * (msg + slw * u) + b_ref[...]

    h = jnp.maximum(gcn_layer(x_ref[...], w1_ref, b1_ref), 0.0)
    z = gcn_layer(h, w2_ref, b2_ref)                     # dropout: eval -> identity
    logits = z * inv_t
    cmask = lax.broadcasted_iota(jnp.int32, logits.shape, 1) < n_class
    logits = jnp.where(cmask, logits, -jnp.inf)
    m = jnp.max(logits, axis=1, keepdims=True)
    s = logits - m
    out_ref[...] = s - jnp.log(jnp.sum(jnp.exp(s), axis=1, keepdims=True))


# --------------------------------------------------------------------------- #
# wrapper
# --------------------------------------------------------------------------- #
def cog_forward(x, adj, params, *, T=0.2, force_tiled=False, tile_override=None):
    """Pallas equivalent of GCN.forward(x, adj) -> log-probs (2-layer GCN, T=0.2)."""
    N, nfeat = x.shape
    nhid = params["w1"].shape[1]
    nclass = params["w2"].shape[1]
    Hp = _round_up(nhid, 128)
    Cp = _round_up(nclass, 128)
    inv_t = float(1.0 / T)
    budget = _vmem_budget()

    # zero-pad feature dims to 128 lanes (exact: zero W1 columns produce zero
    # hidden features, zero W2 rows ignore them, padded logits masked later)
    w1 = _pad2(params["w1"], 0, Hp - nhid)
    b1 = _pad2(jnp.reshape(params["b1"], (1, -1)), 0, Hp - nhid)
    w2 = _pad2(params["w2"], Hp - nhid, Cp - nclass)
    b2 = _pad2(jnp.reshape(params["b2"], (1, -1)), 0, Cp - nclass)

    # ---------------- small-N fast path: adj resident, one pallas_call ----------
    Npf = _round_up(N, 128)
    fused_est = (Npf * Npf * 16                              # adj f32/bf16 + temps
                 + Npf * (nfeat + 3 * Hp + 3 * Cp) * 4
                 + (nfeat * Hp + Hp * Cp + Hp + Cp) * 4)
    if (not force_tiled) and fused_est <= 0.45 * budget:
        adjp = _pad2(adj, Npf - N, Npf - N)
        xp = _pad2(x, Npf - N, 0)
        kern = functools.partial(_fused_small_kernel, inv_t=inv_t, n_class=nclass)
        out = pl.pallas_call(
            kern,
            out_shape=jax.ShapeDtypeStruct((Npf, Cp), jnp.float32),
            compiler_params=pltpu.CompilerParams(
                vmem_limit_bytes=_limit(fused_est, budget)),
        )(adjp, xp, w1, b1, w2, b2)
        return out[:N, :nclass]

    # ---------------- tiled path ------------------------------------------------
    tile = tile_override if tile_override is not None else _pick_tile(
        max(nfeat, Hp), max(Hp, Cp), budget)
    tile = min(tile, _round_up(N, 128))
    Np = _round_up(N, tile)        # pad N to a multiple of the tile (zeros are inert)
    nr = Np // tile                # row tiles      ("parallel")
    nk = Np // tile                # contraction k  ("arbitrary", innermost)

    adjp = _pad2(adj, Np - N, Np - N)
    xp = _pad2(x, Np - N, 0)

    # pass 1: degree / self-loop prep fused with the one-time f32 -> bf16 adj cast
    prep_est = 2 * (tile * tile * 6 + 2 * tile * 4) + 2 * tile * 4
    adj_bf16, dinv, slw = pl.pallas_call(
        _prep_kernel,
        out_shape=(jax.ShapeDtypeStruct((Np, Np), jnp.bfloat16),
                   jax.ShapeDtypeStruct((Np, 1), jnp.float32),
                   jax.ShapeDtypeStruct((Np, 1), jnp.float32)),
        grid=(nr, nk),
        in_specs=[pl.BlockSpec((tile, tile), lambda i, k: (i, k))],
        out_specs=(pl.BlockSpec((tile, tile), lambda i, k: (i, k)),
                   pl.BlockSpec((tile, 1), lambda i, k: (i, 0)),
                   pl.BlockSpec((tile, 1), lambda i, k: (i, 0))),
        scratch_shapes=[pltpu.VMEM((tile, 1), jnp.float32),
                        pltpu.VMEM((tile, 1), jnp.float32)],
        compiler_params=pltpu.CompilerParams(
            dimension_semantics=("parallel", "arbitrary"),
            vmem_limit_bytes=_limit(prep_est, budget)),
    )(adjp)

    def precompute_u(h, w, fin, fout_p):
        # U = dinv * (H @ W): hoisted out of the message-passing loop, bf16 output
        est = 2 * (tile * fin * 4 + fin * fout_p * 4 + tile * 4 + tile * fout_p * 2)
        return pl.pallas_call(
            _feat_kernel,
            out_shape=jax.ShapeDtypeStruct((Np, fout_p), jnp.bfloat16),
            grid=(nr,),
            in_specs=[pl.BlockSpec((tile, fin), lambda i: (i, 0)),
                      pl.BlockSpec((fin, fout_p), lambda i: (0, 0)),
                      pl.BlockSpec((tile, 1), lambda i: (i, 0))],
            out_specs=pl.BlockSpec((tile, fout_p), lambda i: (i, 0)),
            compiler_params=pltpu.CompilerParams(
                dimension_semantics=("parallel",),
                vmem_limit_bytes=_limit(est, budget)),
        )(h, w, dinv)

    def propagate(u_bf16, b, fout_p, *, relu, n_valid):
        est = (2 * (tile * tile * 2 + 2 * tile * fout_p * 2 + 2 * tile * 4
                    + fout_p * 4 + tile * fout_p * 4) + tile * fout_p * 4)
        kern = functools.partial(_layer_kernel, relu=relu, inv_t=inv_t,
                                 n_valid_cols=n_valid)
        return pl.pallas_call(
            kern,
            out_shape=jax.ShapeDtypeStruct((Np, fout_p), jnp.float32),
            grid=(nr, nk),
            in_specs=[
                pl.BlockSpec((tile, tile), lambda i, k: (i, k)),    # adj tile (bf16)
                pl.BlockSpec((tile, fout_p), lambda i, k: (k, 0)),  # U, k-block
                pl.BlockSpec((tile, fout_p), lambda i, k: (i, 0)),  # U, row tile
                pl.BlockSpec((tile, 1), lambda i, k: (i, 0)),       # D^{-1/2} tile
                pl.BlockSpec((tile, 1), lambda i, k: (i, 0)),       # self-loop fill
                pl.BlockSpec((1, fout_p), lambda i, k: (0, 0)),     # bias
            ],
            out_specs=pl.BlockSpec((tile, fout_p), lambda i, k: (i, 0)),
            scratch_shapes=[pltpu.VMEM((tile, fout_p), jnp.float32)],
            compiler_params=pltpu.CompilerParams(
                dimension_semantics=("parallel", "arbitrary"),
                vmem_limit_bytes=_limit(est, budget)),
        )(adj_bf16, u_bf16, u_bf16, dinv, slw, b)

    u1 = precompute_u(xp, w1, nfeat, Hp)
    h = propagate(u1, b1, Hp, relu=True, n_valid=Hp)
    # dropout between the convs: eval mode -> identity
    u2 = precompute_u(h, w2, Hp, Cp)
    out = propagate(u2, b2, Cp, relu=False, n_valid=nclass)
    return out[:N, :nclass]


# --------------------------------------------------------------------------- #
# pure-JAX reference & test
# --------------------------------------------------------------------------- #
def cog_forward_ref(x, adj, params, *, T=0.2):
    N = adj.shape[0]
    eye = jnp.eye(N, dtype=bool)
    diag = jnp.sum(jnp.where(eye, adj, 0.0), axis=1, keepdims=True)
    a_hat = jnp.where(eye, jnp.where(diag != 0.0, diag, 1.0), adj)
    deg = jnp.sum(a_hat, axis=1)
    dinv = jnp.where(deg > 0.0, 1.0 / jnp.sqrt(deg), 0.0)
    a_norm = dinv[:, None] * a_hat * dinv[None, :]
    h = jnp.maximum(a_norm @ (x @ params["w1"]) + params["b1"], 0.0)
    z = a_norm @ (h @ params["w2"]) + params["b2"]
    return jax.nn.log_softmax(z / T, axis=1)


def _glorot(key, shape):
    limit = (6.0 / (shape[0] + shape[1])) ** 0.5
    return jax.random.uniform(key, shape, jnp.float32, -limit, limit)


def _make_graph(key, n, nfeat, density_thresh):
    kx, kadj = jax.random.split(key)
    x = jax.random.normal(kx, (n, nfeat), jnp.float32)
    a = (jax.random.uniform(kadj, (n, n)) > density_thresh).astype(jnp.float32)
    adj = jnp.maximum(a, a.T) * (1.0 - jnp.eye(n, dtype=jnp.float32))
    return x, adj


if __name__ == "__main__":
    # small shapes consistent with the module: N nodes, model_s = GCN(nfeat, nhid, nclass)
    N, nfeat, nhid, nclass = 32, 16, 32, 8

    key = jax.random.PRNGKey(0)
    kg, k1, k2, kg2 = jax.random.split(key, 4)

    x, adj = _make_graph(kg, N, nfeat, 0.7)
    params = {
        "w1": _glorot(k1, (nfeat, nhid)),          # GCNConv: glorot weight, zero bias
        "b1": jnp.zeros((1, nhid), jnp.float32),
        "w2": _glorot(k2, (nhid, nclass)),
        "b2": jnp.zeros((1, nclass), jnp.float32),
    }

    ref = cog_forward_ref(x, adj, params)
    out_fused = jax.block_until_ready(cog_forward(x, adj, params))
    out_tiled = jax.block_until_ready(cog_forward(x, adj, params, force_tiled=True))
    assert out_fused.shape == (N, nclass) and out_tiled.shape == (N, nclass)
    assert jnp.allclose(out_fused, ref, atol=5e-2, rtol=2e-2), "fused path mismatch"
    assert jnp.allclose(out_tiled, ref, atol=5e-2, rtol=2e-2), "tiled path mismatch"

    # exercise the multi-tile accumulator path (2x2 grid of 128-wide tiles)
    N2 = 200
    x2, adj2 = _make_graph(kg2, N2, nfeat, 0.9)
    ref2 = cog_forward_ref(x2, adj2, params)
    out2 = jax.block_until_ready(
        cog_forward(x2, adj2, params, force_tiled=True, tile_override=128))
    assert out2.shape == (N2, nclass)
    assert jnp.allclose(out2, ref2, atol=5e-2, rtol=2e-2), "multi-tile path mismatch"

    print("KERNEL_OK")
</pallas_src>

<mosaic_0001>
module attributes {stable_mosaic.version = 11 : i64} {
  func.func @_fused_small_kernel(%arg0: memref<128x128xf32, #tpu.memory_space<vmem>>, %arg1: memref<128x16xf32, #tpu.memory_space<vmem>>, %arg2: memref<16x128xf32, #tpu.memory_space<vmem>>, %arg3: memref<1x128xf32, #tpu.memory_space<vmem>>, %arg4: memref<128x128xf32, #tpu.memory_space<vmem>>, %arg5: memref<1x128xf32, #tpu.memory_space<vmem>>, %arg6: memref<128x128xf32, #tpu.memory_space<vmem>>) attributes {dimension_semantics = [], scalar_prefetch = 0 : i64, scratch_operands = 0 : i64, tpu.core_type = #tpu.core_type<tc>} {
    %c0 = arith.constant 0 : index
    %c0_0 = arith.constant 0 : index
    %0 = vector.load %arg0[%c0, %c0_0] : memref<128x128xf32, #tpu.memory_space<vmem>>, vector<128x128xf32>
    %1 = tpu.iota {dimensions = array<i32: 0>} : vector<128x128xi32>
    %2 = tpu.iota {dimensions = array<i32: 1>} : vector<128x128xi32>
    %3 = arith.cmpi eq, %1, %2 : vector<128x128xi32>
    %cst = arith.constant 0.000000e+00 : f32
    %4 = vector.broadcast %cst : f32 to vector<128x128xf32>
    %5 = arith.select %3, %0, %4 : vector<128x128xi1>, vector<128x128xf32>
    %cst_1 = arith.constant dense<0.000000e+00> : vector<128xf32>
    %6 = vector.multi_reduction <add>, %5, %cst_1 [1] : vector<128x128xf32> to vector<128xf32>
    %7 = vector.shape_cast %6 : vector<128xf32> to vector<128x1xf32>
    %cst_2 = arith.constant 0.000000e+00 : f32
    %8 = vector.broadcast %cst_2 : f32 to vector<128x1xf32>
    %9 = arith.cmpf one, %7, %8 : vector<128x1xf32>
    %cst_3 = arith.constant 0.000000e+00 : f32
    %cst_4 = arith.constant 1.000000e+00 : f32
    %10 = vector.broadcast %cst_3 : f32 to vector<128x1xf32>
    %11 = vector.broadcast %cst_4 : f32 to vector<128x1xf32>
    %12 = arith.select %9, %10, %11 : vector<128x1xi1>, vector<128x1xf32>
    %cst_5 = arith.constant dense<0.000000e+00> : vector<128xf32>
    %13 = vector.multi_reduction <add>, %0, %cst_5 [1] : vector<128x128xf32> to vector<128xf32>
    %14 = vector.shape_cast %13 : vector<128xf32> to vector<128x1xf32>
    %15 = arith.addf %14, %12 : vector<128x1xf32>
    %cst_6 = arith.constant 0.000000e+00 : f32
    %16 = vector.broadcast %cst_6 : f32 to vector<128x1xf32>
    %17 = arith.cmpf ogt, %15, %16 : vector<128x1xf32>
    %18 = math.rsqrt %15 : vector<128x1xf32>
    %cst_7 = arith.constant 0.000000e+00 : f32
    %19 = vector.broadcast %cst_7 : f32 to vector<128x1xf32>
    %20 = arith.select %17, %18, %19 : vector<128x1xi1>, vector<128x1xf32>
    %21 = arith.truncf %0 : vector<128x128xf32> to vector<128x128xbf16>
    %c0_8 = arith.constant 0 : index
    %c0_9 = arith.constant 0 : index
    %22 = vector.load %arg1[%c0_8, %c0_9] : memref<128x16xf32, #tpu.memory_space<vmem>>, vector<128x16xf32>
    %c0_10 = arith.constant 0 : index
    %c0_11 = arith.constant 0 : index
    %23 = vector.load %arg2[%c0_10, %c0_11] : memref<16x128xf32, #tpu.memory_space<vmem>>, vector<16x128xf32>
    %cst_12 = arith.constant dense<0.000000e+00> : vector<128x128xf32>
    %24 = tpu.matmul %22, %23, %cst_12 {dimension_numbers = #tpu.dot_dimension_numbers<[1], [0], [0], [1], [0, 0, 1, 1], [], []>} : vector<128x16xf32>, vector<16x128xf32>, vector<128x128xf32> -> vector<128x128xf32>
    %25 = vector.broadcast %20 : vector<128x1xf32> to vector<128x128xf32>
    %26 = arith.mulf %25, %24 : vector<128x128xf32>
    %27 = arith.truncf %26 : vector<128x128xf32> to vector<128x128xbf16>
    %cst_13 = arith.constant dense<0.000000e+00> : vector<128x128xf32>
    %28 = tpu.matmul %21, %27, %cst_13 {dimension_numbers = #tpu.dot_dimension_numbers<[1], [0], [0], [1], [0, 0, 1, 1], [], []>} : vector<128x128xbf16>, vector<128x128xbf16>, vector<128x128xf32> -> vector<128x128xf32>
    %29 = vector.broadcast %12 : vector<128x1xf32> to vector<128x128xf32>
    %30 = arith.mulf %29, %26 : vector<128x128xf32>
    %31 = arith.addf %28, %30 : vector<128x128xf32>
    %32 = vector.broadcast %20 : vector<128x1xf32> to vector<128x128xf32>
    %33 = arith.mulf %32, %31 : vector<128x128xf32>
    %c0_14 = arith.constant 0 : index
    %c0_15 = arith.constant 0 : index
    %34 = vector.load %arg3[%c0_14, %c0_15] : memref<1x128xf32, #tpu.memory_space<vmem>>, vector<1x128xf32>
    %35 = vector.broadcast %34 : vector<1x128xf32> to vector<128x128xf32>
    %36 = arith.addf %33, %35 : vector<128x128xf32>
    %cst_16 = arith.constant 0.000000e+00 : f32
    %37 = vector.broadcast %cst_16 : f32 to vector<128x128xf32>
    %38 = arith.maximumf %36, %37 : vector<128x128xf32>
    %c0_17 = arith.constant 0 : index
    %c0_18 = arith.constant 0 : index
    %39 = vector.load %arg4[%c0_17, %c0_18] : memref<128x128xf32, #tpu.memory_space<vmem>>, vector<128x128xf32>
    %cst_19 = arith.constant dense<0.000000e+00> : vector<128x128xf32>
    %40 = tpu.matmul %38, %39, %cst_19 {dimension_numbers = #tpu.dot_dimension_numbers<[1], [0], [0], [1], [0, 0, 1, 1], [], []>} : vector<128x128xf32>, vector<128x128xf32>, vector<128x128xf32> -> vector<128x128xf32>
    %41 = vector.broadcast %20 : vector<128x1xf32> to vector<128x128xf32>
    %42 = arith.mulf %41, %40 : vector<128x128xf32>
    %43 = arith.truncf %42 : vector<128x128xf32> to vector<128x128xbf16>
    %cst_20 = arith.constant dense<0.000000e+00> : vector<128x128xf32>
    %44 = tpu.matmul %21, %43, %cst_20 {dimension_numbers = #tpu.dot_dimension_numbers<[1], [0], [0], [1], [0, 0, 1, 1], [], []>} : vector<128x128xbf16>, vector<128x128xbf16>, vector<128x128xf32> -> vector<128x128xf32>
    %45 = vector.broadcast %12 : vector<128x1xf32> to vector<128x128xf32>
    %46 = arith.mulf %45, %42 : vector<128x128xf32>
    %47 = arith.addf %44, %46 : vector<128x128xf32>
    %48 = vector.broadcast %20 : vector<128x1xf32> to vector<128x128xf32>
    %49 = arith.mulf %48, %47 : vector<128x128xf32>
    %c0_21 = arith.constant 0 : index
    %c0_22 = arith.constant 0 : index
    %50 = vector.load %arg5[%c0_21, %c0_22] : memref<1x128xf32, #tpu.memory_space<vmem>>, vector<1x128xf32>
    %51 = vector.broadcast %50 : vector<1x128xf32> to vector<128x128xf32>
    %52 = arith.addf %49, %51 : vector<128x128xf32>
    %cst_23 = arith.constant 5.000000e+00 : f32
    %53 = vector.broadcast %cst_23 : f32 to vector<128x128xf32>
    %54 = arith.mulf %52, %53 : vector<128x128xf32>
    %55 = tpu.iota {dimensions = array<i32: 1>} : vector<128x128xi32>
    %c8_i32 = arith.constant 8 : i32
    %56 = vector.broadcast %c8_i32 : i32 to vector<128x128xi32>
    %57 = arith.cmpi slt, %55, %56 : vector<128x128xi32>
    %cst_24 = arith.constant 0xFF800000 : f32
    %58 = vector.broadcast %cst_24 : f32 to vector<128x128xf32>
    %59 = arith.select %57, %54, %58 : vector<128x128xi1>, vector<128x128xf32>
    %cst_25 = arith.constant dense<0xFF800000> : vector<128xf32>
    %60 = vector.multi_reduction <maximumf>, %59, %cst_25 [1] : vector<128x128xf32> to vector<128xf32>
    %61 = vector.shape_cast %60 : vector<128xf32> to vector<128x1xf32>
    %62 = vector.broadcast %61 : vector<128x1xf32> to vector<128x128xf32>
    %63 = arith.subf %59, %62 : vector<128x128xf32>
    %64 = math.exp %63 : vector<128x128xf32>
    %cst_26 = arith.constant dense<0.000000e+00> : vector<128xf32>
    %65 = vector.multi_reduction <add>, %64, %cst_26 [1] : vector<128x128xf32> to vector<128xf32>
    %66 = vector.shape_cast %65 : vector<128xf32> to vector<128x1xf32>
    %67 = math.log %66 : vector<128x1xf32>
    %68 = vector.broadcast %67 : vector<128x1xf32> to vector<128x128xf32>
    %69 = arith.subf %63, %68 : vector<128x128xf32>
    %c0_27 = arith.constant 0 : index
    %c0_28 = arith.constant 0 : index
    %70 = vector.load %arg6[%c0_27, %c0_28] : memref<128x128xf32, #tpu.memory_space<vmem>>, vector<128x128xf32>
    tpu.vector_store %arg6[%c0_27, %c0_28], %69 {strides = array<i32>} : memref<128x128xf32, #tpu.memory_space<vmem>>, vector<128x128xf32>,
    return
  }
}

</mosaic_0001>

<llo_original>
// kernel: tpu_custom_call.1
$region0: #{tpu_custom_call.1}
  #allocation0 [shape = 'u32[]', space=smem, size = 0x4, offset = 0x4, fixed_abs, tag = 'smem constant byte address 0x4 - core index']
  #allocation1 [shape = 'u32[144,128]{1,0:T(1,128)}', space=vmem, size = 0x12000, scoped, tag = 'internal scratch']
  %s0 = inlined_call_operand.vmem [shape: f32[128,128], index: 0, kind: input, shape index: {}]
  %s1 = inlined_call_operand.vmem [shape: f32[128,16], index: 1, kind: input, shape index: {}]
  %s2 = inlined_call_operand.vmem [shape: f32[16,128], index: 2, kind: input, shape index: {}]
  %s3 = inlined_call_operand.vmem [shape: f32[1,128], index: 3, kind: input, shape index: {}]
  %s4 = inlined_call_operand.hbm [shape: f32[128,128], index: 4, kind: input, shape index: {}]
  %s5 = inlined_call_operand.vmem [shape: f32[1,128], index: 5, kind: input, shape index: {}]
  %s6 = inlined_call_operand.hbm [shape: f32[128,128], index: 6, kind: output, shape index: {}]
  %s7 = sld [smem:[#allocation0]]
  $region38: #{tpu_custom_call.1} parent=0
    _
  %s9 = ssub.s32 1, %s7
  %s10 = scalar_select 0, %s9, %s7
  $region1: #{tpu_custom_call.1} parent=0
    #allocation2 [shape = 'u8[65536]{0}', space=vmem, size = 0x10000, scoped, tag = 'input window, operand 4, single buffered']
    #allocation3 [shape = 's32[1]{0}', space=sflag, size = 0x4, scoped, tag = 'scoped memory for tpu_custom_call.1']
    #allocation4 [shape = 's32[1]{0}', space=sflag, size = 0x4, scoped, tag = 'scoped memory for tpu_custom_call.1']
    #allocation5 [shape = 'u8[65536]{0}', space=vmem, size = 0x10000, scoped, tag = 'output window, operand 0, single buffered']
    %11 = vsyncpa [#allocation3], 0
    %12 = vsyncpa [#allocation4], 0
    // Predicated region
    $region2: #{tpu_custom_call.1} parent=1 // pred_check
      _
    $region3: #{tpu_custom_call.1} parent=1 // pred_check_branch
      %14 = sbr.rel (0) target = $region5
    $region4: #{tpu_custom_call.1} parent=1 // pred_region
      _
    $region5: #{tpu_custom_call.1} parent=1 // pred_fallthru
      _
    // Predicated region
    $region6: #{tpu_custom_call.1} parent=1 // pred_check
      _
    $region7: #{tpu_custom_call.1} parent=1 // pred_check_branch
      %16 = sbr.rel (0) target = $region9
    $region8: #{tpu_custom_call.1} parent=1 // pred_region
      _
    $region9: #{tpu_custom_call.1} parent=1 // pred_fallthru
      _
    // Predicated region
    $region10: #{tpu_custom_call.1} parent=1 // pred_check
      _
    $region11: #{tpu_custom_call.1} parent=1 // pred_check_branch
      %18 = sbr.rel (0) target = $region13
    $region12: #{tpu_custom_call.1} parent=1 // pred_region
      _
    $region13: #{tpu_custom_call.1} parent=1 // pred_fallthru
      _
    // Predicated region
    $region14: #{tpu_custom_call.1} parent=1 // pred_check
      _
    $region15: #{tpu_custom_call.1} parent=1 // pred_check_branch
      %20 = sbr.rel (0) target = $region17
    $region16: #{tpu_custom_call.1} parent=1 // pred_region
      _
    $region17: #{tpu_custom_call.1} parent=1 // pred_fallthru
      _
    // Predicated region
    $region18: #{tpu_custom_call.1} parent=1 // pred_check
      _
    $region19: #{tpu_custom_call.1} parent=1 // pred_check_branch
      %22 = sbr.rel (0) target = $region21
    $region20: #{tpu_custom_call.1} parent=1 // pred_region
      %s24 = ssub.s32 2048, 2048
      %25 = vsyncadd [#allocation3], %s24
      %s26 = sshll.u32 [#allocation2], 4
      %s27 = int_to_ptr.vmem [resolvable:$true] %s26
      %32 = dma.hbm_to_vmem [thread:$0]  %s4, 2048, %s27, [#allocation3], 128, 128, 8
    $region21: #{tpu_custom_call.1} parent=1 // pred_fallthru
      _
    // Predicated region
    $region22: #{tpu_custom_call.1} parent=1 // pred_check
      _
    $region23: #{tpu_custom_call.1} parent=1 // pred_check_branch
      %34 = sbr.rel (0) target = $region25
    $region24: #{tpu_custom_call.1} parent=1 // pred_region
      _
    $region25: #{tpu_custom_call.1} parent=1 // pred_fallthru
      _
    // Predicated region
    $region26: #{tpu_custom_call.1} parent=1 // pred_check
      _
    $region27: #{tpu_custom_call.1} parent=1 // pred_check_branch
      %36 = sbr.rel (0) target = $region29
    $region28: #{tpu_custom_call.1} parent=1 // pred_region
      %37 = dma.done [#allocation3], 2048
    $region29: #{tpu_custom_call.1} parent=1 // pred_fallthru
      _
    %v39 = vld [vmem:[%s0] sm:$0xff]
    %v40 = vld [vmem:[%s0 + $0x8] sm:$0xff]
    %v41 = vld [vmem:[%s0 + $0x10] sm:$0xff]
    %v42 = vld [vmem:[%s0 + $0x18] sm:$0xff]
    %v43 = vld [vmem:[%s0 + $0x20] sm:$0xff]
    %v44 = vld [vmem:[%s0 + $0x28] sm:$0xff]
    %v45 = vld [vmem:[%s0 + $0x30] sm:$0xff]
    %v46 = vld [vmem:[%s0 + $0x38] sm:$0xff]
    %v47 = vld [vmem:[%s0 + $0x40] sm:$0xff]
    %v48 = vld [vmem:[%s0 + $0x48] sm:$0xff]
    %v49 = vld [vmem:[%s0 + $0x50] sm:$0xff]
    %v50 = vld [vmem:[%s0 + $0x58] sm:$0xff]
    %v51 = vld [vmem:[%s0 + $0x60] sm:$0xff]
    %v52 = vld [vmem:[%s0 + $0x68] sm:$0xff]
    %v53 = vld [vmem:[%s0 + $0x70] sm:$0xff]
    %v54 = vld [vmem:[%s0 + $0x78] sm:$0xff]
    %v55 = vlaneseq
    %v56 = vshrl.u32 %v55, 7
    %v57 = vadd.s32 %v56, 8
    %v58 = vadd.s32 %v56, 16
    %v59 = vadd.s32 %v56, 24
    %v60 = vadd.s32 %v56, 32
    %v61 = vadd.s32 %v56, 40
    %v62 = vadd.s32 %v56, 48
    %v63 = vadd.s32 %v56, 56
    %v64 = vadd.s32 %v56, 64
    %v65 = vadd.s32 %v56, 72
    %v66 = vadd.s32 %v56, 80
    %v67 = vadd.s32 %v56, 88
    %v68 = vadd.s32 %v56, 96
    %v69 = vadd.s32 %v56, 104
    %v70 = vadd.s32 %v56, 112
    %v71 = vadd.s32 %v56, 120
    %v72 = vlaneseq
    %v73 = vand.u32 %v72, 127
    %vm74 = vcmp.eq.s32.totalorder %v56, %v73
    %vm75 = vcmp.eq.s32.totalorder %v57, %v73
    %vm76 = vcmp.eq.s32.totalorder %v58, %v73
    %vm77 = vcmp.eq.s32.totalorder %v59, %v73
    %vm78 = vcmp.eq.s32.totalorder %v60, %v73
    %vm79 = vcmp.eq.s32.totalorder %v61, %v73
    %vm80 = vcmp.eq.s32.totalorder %v62, %v73
    %vm81 = vcmp.eq.s32.totalorder %v63, %v73
    %vm82 = vcmp.eq.s32.totalorder %v64, %v73
    %vm83 = vcmp.eq.s32.totalorder %v65, %v73
    %vm84 = vcmp.eq.s32.totalorder %v66, %v73
    %vm85 = vcmp.eq.s32.totalorder %v67, %v73
    %vm86 = vcmp.eq.s32.totalorder %v68, %v73
    %vm87 = vcmp.eq.s32.totalorder %v69, %v73
    %vm88 = vcmp.eq.s32.totalorder %v70, %v73
    %vm89 = vcmp.eq.s32.totalorder %v71, %v73
    %v90 = vsel %vm74, %v39, 0.0
    %v91 = vsel %vm75, %v40, 0.0
    %v92 = vsel %vm76, %v41, 0.0
    %v93 = vsel %vm77, %v42, 0.0
    %v94 = vsel %vm78, %v43, 0.0
    %v95 = vsel %vm79, %v44, 0.0
    %v96 = vsel %vm80, %v45, 0.0
    %v97 = vsel %vm81, %v46, 0.0
    %v98 = vsel %vm82, %v47, 0.0
    %v99 = vsel %vm83, %v48, 0.0
    %v100 = vsel %vm84, %v49, 0.0
    %v101 = vsel %vm85, %v50, 0.0
    %v102 = vsel %vm86, %v51, 0.0
    %v103 = vsel %vm87, %v52, 0.0
    %v104 = vsel %vm88, %v53, 0.0
    %v105 = vsel %vm89, %v54, 0.0
    %106 = vadd.xlane.f32.xlu0 %v90
    %v107 = vpop.xlane.xlu0 %106
    %108 = vadd.xlane.f32.xlu0 %v91
    %v109 = vpop.xlane.xlu0 %108
    %110 = vadd.xlane.f32.xlu0 %v92
    %v111 = vpop.xlane.xlu0 %110
    %112 = vadd.xlane.f32.xlu0 %v93
    %v113 = vpop.xlane.xlu0 %112
    %114 = vadd.xlane.f32.xlu0 %v94
    %v115 = vpop.xlane.xlu0 %114
    %116 = vadd.xlane.f32.xlu0 %v95
    %v117 = vpop.xlane.xlu0 %116
    %118 = vadd.xlane.f32.xlu0 %v96
    %v119 = vpop.xlane.xlu0 %118
    %120 = vadd.xlane.f32.xlu0 %v97
    %v121 = vpop.xlane.xlu0 %120
    %122 = vadd.xlane.f32.xlu0 %v98
    %v123 = vpop.xlane.xlu0 %122
    %124 = vadd.xlane.f32.xlu0 %v99
    %v125 = vpop.xlane.xlu0 %124
    %126 = vadd.xlane.f32.xlu0 %v100
    %v127 = vpop.xlane.xlu0 %126
    %128 = vadd.xlane.f32.xlu0 %v101
    %v129 = vpop.xlane.xlu0 %128
    %130 = vadd.xlane.f32.xlu0 %v102
    %v131 = vpop.xlane.xlu0 %130
    %132 = vadd.xlane.f32.xlu0 %v103
    %v133 = vpop.xlane.xlu0 %132
    %134 = vadd.xlane.f32.xlu0 %v104
    %v135 = vpop.xlane.xlu0 %134
    %136 = vadd.xlane.f32.xlu0 %v105
    %v137 = vpop.xlane.xlu0 %136
    %vm138 = vcmp.ne.f32.partialorder %v107, 0.0
    %vm139 = vcmp.ne.f32.partialorder %v109, 0.0
    %vm140 = vcmp.ne.f32.partialorder %v111, 0.0
    %vm141 = vcmp.ne.f32.partialorder %v113, 0.0
    %vm142 = vcmp.ne.f32.partialorder %v115, 0.0
    %vm143 = vcmp.ne.f32.partialorder %v117, 0.0
    %vm144 = vcmp.ne.f32.partialorder %v119, 0.0
    %vm145 = vcmp.ne.f32.partialorder %v121, 0.0
    %vm146 = vcmp.ne.f32.partialorder %v123, 0.0
    %vm147 = vcmp.ne.f32.partialorder %v125, 0.0
    %vm148 = vcmp.ne.f32.partialorder %v127, 0.0
    %vm149 = vcmp.ne.f32.partialorder %v129, 0.0
    %vm150 = vcmp.ne.f32.partialorder %v131, 0.0
    %vm151 = vcmp.ne.f32.partialorder %v133, 0.0
    %vm152 = vcmp.ne.f32.partialorder %v135, 0.0
    %vm153 = vcmp.ne.f32.partialorder %v137, 0.0
    %v154 = vsel %vm138, 0.0, 1.0
    %v155 = vsel %vm139, 0.0, 1.0
    %v156 = vsel %vm140, 0.0, 1.0
    %v157 = vsel %vm141, 0.0, 1.0
    %v158 = vsel %vm142, 0.0, 1.0
    %v159 = vsel %vm143, 0.0, 1.0
    %v160 = vsel %vm144, 0.0, 1.0
    %v161 = vsel %vm145, 0.0, 1.0
    %v162 = vsel %vm146, 0.0, 1.0
    %v163 = vsel %vm147, 0.0, 1.0
    %v164 = vsel %vm148, 0.0, 1.0
    %v165 = vsel %vm149, 0.0, 1.0
    %v166 = vsel %vm150, 0.0, 1.0
    %v167 = vsel %vm151, 0.0, 1.0
    %v168 = vsel %vm152, 0.0, 1.0
    %v169 = vsel %vm153, 0.0, 1.0
    %170 = vadd.xlane.f32.xlu0 %v39
    %v171 = vpop.xlane.xlu0 %170
    %172 = vadd.xlane.f32.xlu0 %v40
    %v173 = vpop.xlane.xlu0 %172
    %174 = vadd.xlane.f32.xlu0 %v41
    %v175 = vpop.xlane.xlu0 %174
    %176 = vadd.xlane.f32.xlu0 %v42
    %v177 = vpop.xlane.xlu0 %176
    %178 = vadd.xlane.f32.xlu0 %v43
    %v179 = vpop.xlane.xlu0 %178
    %180 = vadd.xlane.f32.xlu0 %v44
    %v181 = vpop.xlane.xlu0 %180
    %182 = vadd.xlane.f32.xlu0 %v45
    %v183 = vpop.xlane.xlu0 %182
    %184 = vadd.xlane.f32.xlu0 %v46
    %v185 = vpop.xlane.xlu0 %184
    %186 = vadd.xlane.f32.xlu0 %v47
    %v187 = vpop.xlane.xlu0 %186
    %188 = vadd.xlane.f32.xlu0 %v48
    %v189 = vpop.xlane.xlu0 %188
    %190 = vadd.xlane.f32.xlu0 %v49
    %v191 = vpop.xlane.xlu0 %190
    %192 = vadd.xlane.f32.xlu0 %v50
    %v193 = vpop.xlane.xlu0 %192
    %194 = vadd.xlane.f32.xlu0 %v51
    %v195 = vpop.xlane.xlu0 %194
    %196 = vadd.xlane.f32.xlu0 %v52
    %v197 = vpop.xlane.xlu0 %196
    %198 = vadd.xlane.f32.xlu0 %v53
    %v199 = vpop.xlane.xlu0 %198
    %200 = vadd.xlane.f32.xlu0 %v54
    %v201 = vpop.xlane.xlu0 %200
    %v202 = vadd.f32 %v171, %v154
    %v203 = vadd.f32 %v173, %v155
    %v204 = vadd.f32 %v175, %v156
    %v205 = vadd.f32 %v177, %v157
    %v206 = vadd.f32 %v179, %v158
    %v207 = vadd.f32 %v181, %v159
    %v208 = vadd.f32 %v183, %v160
    %v209 = vadd.f32 %v185, %v161
    %v210 = vadd.f32 %v187, %v162
    %v211 = vadd.f32 %v189, %v163
    %v212 = vadd.f32 %v191, %v164
    %v213 = vadd.f32 %v193, %v165
    %v214 = vadd.f32 %v195, %v166
    %v215 = vadd.f32 %v197, %v167
    %v216 = vadd.f32 %v199, %v168
    %v217 = vadd.f32 %v201, %v169
    %vm218 = vcmp.gt.f32.partialorder %v202, 0.0
    %vm219 = vcmp.gt.f32.partialorder %v203, 0.0
    %vm220 = vcmp.gt.f32.partialorder %v204, 0.0
    %vm221 = vcmp.gt.f32.partialorder %v205, 0.0
    %vm222 = vcmp.gt.f32.partialorder %v206, 0.0
    %vm223 = vcmp.gt.f32.partialorder %v207, 0.0
    %vm224 = vcmp.gt.f32.partialorder %v208, 0.0
    %vm225 = vcmp.gt.f32.partialorder %v209, 0.0
    %vm226 = vcmp.gt.f32.partialorder %v210, 0.0
    %vm227 = vcmp.gt.f32.partialorder %v211, 0.0
    %vm228 = vcmp.gt.f32.partialorder %v212, 0.0
    %vm229 = vcmp.gt.f32.partialorder %v213, 0.0
    %vm230 = vcmp.gt.f32.partialorder %v214, 0.0
    %vm231 = vcmp.gt.f32.partialorder %v215, 0.0
    %vm232 = vcmp.gt.f32.partialorder %v216, 0.0
    %vm233 = vcmp.gt.f32.partialorder %v217, 0.0
    %v234 = vrsqrt.pop %v202
    %v235 = vrsqrt.pop %v203
    %v236 = vrsqrt.pop %v204
    %v237 = vrsqrt.pop %v205
    %v238 = vrsqrt.pop %v206
    %v239 = vrsqrt.pop %v207
    %v240 = vrsqrt.pop %v208
    %v241 = vrsqrt.pop %v209
    %v242 = vrsqrt.pop %v210
    %v243 = vrsqrt.pop %v211
    %v244 = vrsqrt.pop %v212
    %v245 = vrsqrt.pop %v213
    %v246 = vrsqrt.pop %v214
    %v247 = vrsqrt.pop %v215
    %v248 = vrsqrt.pop %v216
    %v249 = vrsqrt.pop %v217
    %v250 = vsel %vm218, %v234, 0.0
    %v251 = vsel %vm219, %v235, 0.0
    %v252 = vsel %vm220, %v236, 0.0
    %v253 = vsel %vm221, %v237, 0.0
    %v254 = vsel %vm222, %v238, 0.0
    %v255 = vsel %vm223, %v239, 0.0
    %v256 = vsel %vm224, %v240, 0.0
    %v257 = vsel %vm225, %v241, 0.0
    %v258 = vsel %vm226, %v242, 0.0
    %v259 = vsel %vm227, %v243, 0.0
    %v260 = vsel %vm228, %v244, 0.0
    %v261 = vsel %vm229, %v245, 0.0
    %v262 = vsel %vm230, %v246, 0.0
    %v263 = vsel %vm231, %v247, 0.0
    %v264 = vsel %vm232, %v248, 0.0
    %v265 = vsel %vm233, %v249, 0.0
    %v266 = vpack.c.bf16 %v40, %v39
    %v267 = vpack.c.bf16 %v42, %v41
    %v268 = vpack.c.bf16 %v44, %v43
    %v269 = vpack.c.bf16 %v46, %v45
    %v270 = vpack.c.bf16 %v48, %v47
    %v271 = vpack.c.bf16 %v50, %v49
    %v272 = vpack.c.bf16 %v52, %v51
    %v273 = vpack.c.bf16 %v54, %v53
    %v274 = vld [vmem:[%s1] sm:$0xff]
    %v275 = vld [vmem:[%s1 + $0x8] sm:$0xff]
    %v276 = vld [vmem:[%s1 + $0x10] sm:$0xff]
    %v277 = vld [vmem:[%s1 + $0x18] sm:$0xff]
    %v278 = vld [vmem:[%s1 + $0x20] sm:$0xff]
    %v279 = vld [vmem:[%s1 + $0x28] sm:$0xff]
    %v280 = vld [vmem:[%s1 + $0x30] sm:$0xff]
    %v281 = vld [vmem:[%s1 + $0x38] sm:$0xff]
    %v282 = vld [vmem:[%s1 + $0x40] sm:$0xff]
    %v283 = vld [vmem:[%s1 + $0x48] sm:$0xff]
    %v284 = vld [vmem:[%s1 + $0x50] sm:$0xff]
    %v285 = vld [vmem:[%s1 + $0x58] sm:$0xff]
    %v286 = vld [vmem:[%s1 + $0x60] sm:$0xff]
    %v287 = vld [vmem:[%s1 + $0x68] sm:$0xff]
    %v288 = vld [vmem:[%s1 + $0x70] sm:$0xff]
    %v289 = vld [vmem:[%s1 + $0x78] sm:$0xff]
    %v290 = vld [vmem:[%s2] sm:$0xff]
    %v291 = vld [vmem:[%s2 + $0x8] sm:$0xff]
    %vm292 = vcmask 130048
    %v294 = vsel %vm292, %v274, 0
    %v297 = vsel %vm292, %v275, 0
    %v300 = vsel %vm292, %v276, 0
    %v303 = vsel %vm292, %v277, 0
    %v306 = vsel %vm292, %v278, 0
    %v309 = vsel %vm292, %v279, 0
    %v312 = vsel %vm292, %v280, 0
    %v315 = vsel %vm292, %v281, 0
    %v318 = vsel %vm292, %v282, 0
    %v321 = vsel %vm292, %v283, 0
    %v324 = vsel %vm292, %v284, 0
    %v327 = vsel %vm292, %v285, 0
    %v330 = vsel %vm292, %v286, 0
    %v333 = vsel %vm292, %v287, 0
    %v336 = vsel %vm292, %v288, 0
    %v339 = vsel %vm292, %v289, 0
    %341 = vmatprep.subr.mxu0 0.0
    %342 = vmatpush1.msra.mxu0 %v290
    %343 = vmatprep.subr.mxu0 0.0
    %344 = vmatpush1.msra.mxu0 %v291
    %345 = vmatprep.subr.mxu0 0.0
    %346 = vmatpush1.msra.mxu0 0.0
    %347 = vmatprep.subr.mxu0 0.0
    %348 = vmatpush1.msra.mxu0 0.0
    %349 = vmatprep.subr.mxu0 0.0
    %350 = vmatpush1.msra.mxu0 0.0
    %351 = vmatprep.subr.mxu0 0.0
    %352 = vmatpush1.msra.mxu0 0.0
    %353 = vmatprep.subr.mxu0 0.0
    %354 = vmatpush1.msra.mxu0 0.0
    %355 = vmatprep.subr.mxu0 0.0
    %356 = vmatpush1.msra.mxu0 0.0
    %357 = vmatprep.subr.mxu0 0.0
    %358 = vmatpush1.msra.mxu0 0.0
    %359 = vmatprep.subr.mxu0 0.0
    %360 = vmatpush1.msra.mxu0 0.0
    %361 = vmatprep.subr.mxu0 0.0
    %362 = vmatpush1.msra.mxu0 0.0
    %363 = vmatprep.subr.mxu0 0.0
    %364 = vmatpush1.msra.mxu0 0.0
    %365 = vmatprep.subr.mxu0 0.0
    %366 = vmatpush1.msra.mxu0 0.0
    %367 = vmatprep.subr.mxu0 0.0
    %368 = vmatpush1.msra.mxu0 0.0
    %369 = vmatprep.subr.mxu0 0.0
    %370 = vmatpush1.msra.mxu0 0.0
    %371 = vmatprep.subr.mxu0 0.0
    %372 = vmatpush1.msra.mxu0 0.0
    %373 = vmatprep.subr.mxu0 0.0
    %374 = vmatpush1.msra.mxu0 0.0
    %375 = vmatprep.subr.mxu0 0.0
    %376 = vmatpush1.msra.mxu0 0.0
    %377 = vmatprep.subr.mxu0 0.0
    %378 = vmatpush1.msra.mxu0 0.0
    %379 = vmatprep.subr.mxu0 0.0
    %380 = vmatpush1.msra.mxu0 0.0
    %381 = vmatprep.subr.mxu0 0.0
    %382 = vmatpush1.msra.mxu0 0.0
    %383 = vmatprep.subr.mxu0 0.0
    %384 = vmatpush1.msra.mxu0 0.0
    %385 = vmatprep.subr.mxu0 0.0
    %386 = vmatpush1.msra.mxu0 0.0
    %387 = vmatprep.subr.mxu0 0.0
    %388 = vmatpush1.msra.mxu0 0.0
    %389 = vmatprep.subr.mxu0 0.0
    %390 = vmatpush1.msra.mxu0 0.0
    %391 = vmatprep.subr.mxu0 0.0
    %392 = vmatpush1.msra.mxu0 0.0
    %393 = vmatprep.subr.mxu0 0.0
    %394 = vmatpush1.msra.mxu0 0.0
    %395 = vmatprep.subr.mxu0 0.0
    %396 = vmatpush1.msra.mxu0 0.0
    %397 = vmatprep.subr.mxu0 0.0
    %398 = vmatpush1.msra.mxu0 0.0
    %399 = vmatprep.subr.mxu0 0.0
    %400 = vmatpush1.msra.mxu0 0.0
    %401 = vmatprep.subr.mxu0 0.0
    %402 = vmatpush1.msra.mxu0 0.0
    %403 = vmatprep.subr.mxu0 0.0
    %404 = vmatpush1.msra.mxu0 0.0
    %405 = vmatprep.mubr.f32.mxu0 0.0
    %406 = vmatmul.mubr.f32.gmra.mrb[0].mxu0 %v294
    %v407 = vpop.f32.mrb[0].mxu0
    %v408 = vadd.f32 0.0, %v407
    %v409 = vpop.f32.mrb[0].mxu0
    %410 = vmatprep.mubr.f32.mxu0 0.0
    %411 = vmatmul.mubr.f32.gmra.mrb[0].mxu0 %v297
    %v412 = vpop.f32.mrb[0].mxu0
    %v413 = vadd.f32 0.0, %v412
    %v414 = vpop.f32.mrb[0].mxu0
    %415 = vmatprep.mubr.f32.mxu0 0.0
    %416 = vmatmul.mubr.f32.gmra.mrb[0].mxu0 %v300
    %v417 = vpop.f32.mrb[0].mxu0
    %v418 = vadd.f32 0.0, %v417
    %v419 = vpop.f32.mrb[0].mxu0
    %420 = vmatprep.mubr.f32.mxu0 0.0
    %421 = vmatmul.mubr.f32.gmra.mrb[0].mxu0 %v303
    %v422 = vpop.f32.mrb[0].mxu0
    %v423 = vadd.f32 0.0, %v422
    %v424 = vpop.f32.mrb[0].mxu0
    %425 = vmatprep.mubr.f32.mxu0 0.0
    %426 = vmatmul.mubr.f32.gmra.mrb[0].mxu0 %v306
    %v427 = vpop.f32.mrb[0].mxu0
    %v428 = vadd.f32 0.0, %v427
    %v429 = vpop.f32.mrb[0].mxu0
    %430 = vmatprep.mubr.f32.mxu0 0.0
    %431 = vmatmul.mubr.f32.gmra.mrb[0].mxu0 %v309
    %v432 = vpop.f32.mrb[0].mxu0
    %v433 = vadd.f32 0.0, %v432
    %v434 = vpop.f32.mrb[0].mxu0
    %435 = vmatprep.mubr.f32.mxu0 0.0
    %436 = vmatmul.mubr.f32.gmra.mrb[0].mxu0 %v312
    %v437 = vpop.f32.mrb[0].mxu0
    %v438 = vadd.f32 0.0, %v437
    %v439 = vpop.f32.mrb[0].mxu0
    %440 = vmatprep.mubr.f32.mxu0 0.0
    %441 = vmatmul.mubr.f32.gmra.mrb[0].mxu0 %v315
    %v442 = vpop.f32.mrb[0].mxu0
    %v443 = vadd.f32 0.0, %v442
    %v444 = vpop.f32.mrb[0].mxu0
    %445 = vmatprep.mubr.f32.mxu0 0.0
    %446 = vmatmul.mubr.f32.gmra.mrb[0].mxu0 %v318
    %v447 = vpop.f32.mrb[0].mxu0
    %v448 = vadd.f32 0.0, %v447
    %v449 = vpop.f32.mrb[0].mxu0
    %450 = vmatprep.mubr.f32.mxu0 0.0
    %451 = vmatmul.mubr.f32.gmra.mrb[0].mxu0 %v321
    %v452 = vpop.f32.mrb[0].mxu0
    %v453 = vadd.f32 0.0, %v452
    %v454 = vpop.f32.mrb[0].mxu0
    %455 = vmatprep.mubr.f32.mxu0 0.0
    %456 = vmatmul.mubr.f32.gmra.mrb[0].mxu0 %v324
    %v457 = vpop.f32.mrb[0].mxu0
    %v458 = vadd.f32 0.0, %v457
    %v459 = vpop.f32.mrb[0].mxu0
    %460 = vmatprep.mubr.f32.mxu0 0.0
    %461 = vmatmul.mubr.f32.gmra.mrb[0].mxu0 %v327
    %v462 = vpop.f32.mrb[0].mxu0
    %v463 = vadd.f32 0.0, %v462
    %v464 = vpop.f32.mrb[0].mxu0
    %465 = vmatprep.mubr.f32.mxu0 0.0
    %466 = vmatmul.mubr.f32.gmra.mrb[0].mxu0 %v330
    %v467 = vpop.f32.mrb[0].mxu0
    %v468 = vadd.f32 0.0, %v467
    %v469 = vpop.f32.mrb[0].mxu0
    %470 = vmatprep.mubr.f32.mxu0 0.0
    %471 = vmatmul.mubr.f32.gmra.mrb[0].mxu0 %v333
    %v472 = vpop.f32.mrb[0].mxu0
    %v473 = vadd.f32 0.0, %v472
    %v474 = vpop.f32.mrb[0].mxu0
    %475 = vmatprep.mubr.f32.mxu0 0.0
    %476 = vmatmul.mubr.f32.gmra.mrb[0].mxu0 %v336
    %v477 = vpop.f32.mrb[0].mxu0
    %v478 = vadd.f32 0.0, %v477
    %v479 = vpop.f32.mrb[0].mxu0
    %480 = vmatprep.mubr.f32.mxu0 0.0
    %481 = vmatmul.mubr.f32.gmra.mrb[0].mxu0 %v339
    %v482 = vpop.f32.mrb[0].mxu0
    %v483 = vadd.f32 0.0, %v482
    %v484 = vpop.f32.mrb[0].mxu0
    %485 = vdwg.mxu0
    %v486 = vmul.f32 %v250, %v408
    %v487 = vmul.f32 %v251, %v413
    %v488 = vmul.f32 %v252, %v418
    %v489 = vmul.f32 %v253, %v423
    %v490 = vmul.f32 %v254, %v428
    %v491 = vmul.f32 %v255, %v433
    %v492 = vmul.f32 %v256, %v438
    %v493 = vmul.f32 %v257, %v443
    %v494 = vmul.f32 %v258, %v448
    %v495 = vmul.f32 %v259, %v453
    %v496 = vmul.f32 %v260, %v458
    %v497 = vmul.f32 %v261, %v463
    %v498 = vmul.f32 %v262, %v468
    %v499 = vmul.f32 %v263, %v473
    %v500 = vmul.f32 %v264, %v478
    %v501 = vmul.f32 %v265, %v483
    %v502 = vpack.c.bf16 %v487, %v486
    %v503 = vpack.c.bf16 %v489, %v488
    %v504 = vpack.c.bf16 %v491, %v490
    %v505 = vpack.c.bf16 %v493, %v492
    %v506 = vpack.c.bf16 %v495, %v494
    %v507 = vpack.c.bf16 %v497, %v496
    %v508 = vpack.c.bf16 %v499, %v498
    %v509 = vpack.c.bf16 %v501, %v500
    %v510 = vmul.f32 %v154, %v486
    %v511 = vmul.f32 %v155, %v487
    %v512 = vmul.f32 %v156, %v488
    %v513 = vmul.f32 %v157, %v489
    %v514 = vmul.f32 %v158, %v490
    %v515 = vmul.f32 %v159, %v491
    %v516 = vmul.f32 %v160, %v492
    %v517 = vmul.f32 %v161, %v493
    %v518 = vmul.f32 %v162, %v494
    %v519 = vmul.f32 %v163, %v495
    %v520 = vmul.f32 %v164, %v496
    %v521 = vmul.f32 %v165, %v497
    %v522 = vmul.f32 %v166, %v498
    %v523 = vmul.f32 %v167, %v499
    %v524 = vmul.f32 %v168, %v500
    %v525 = vmul.f32 %v169, %v501
    %526 = vmatprep.subr.bf16.mxu0 0
    %527 = vmatpush1.bf16.msra.mxu0 %v502
    %528 = vmatprep.subr.bf16.mxu0 0
    %529 = vmatpush1.bf16.msra.mxu0 %v503
    %530 = vmatprep.subr.bf16.mxu0 0
    %531 = vmatpush1.bf16.msra.mxu0 %v504
    %532 = vmatprep.subr.bf16.mxu0 0
    %533 = vmatpush1.bf16.msra.mxu0 %v505
    %534 = vmatprep.subr.bf16.mxu0 0
    %535 = vmatpush1.bf16.msra.mxu0 %v506
    %536 = vmatprep.subr.bf16.mxu0 0
    %537 = vmatpush1.bf16.msra.mxu0 %v507
    %538 = vmatprep.subr.bf16.mxu0 0
    %539 = vmatpush1.bf16.msra.mxu0 %v508
    %540 = vmatprep.subr.bf16.mxu0 0
    %541 = vmatpush1.bf16.msra.mxu0 %v509
    %542 = vmatprep.subr.bf16.mxu0 0
    %543 = vmatpush1.bf16.msra.mxu0 0
    %544 = vmatprep.subr.bf16.mxu0 0
    %545 = vmatpush1.bf16.msra.mxu0 0
    %546 = vmatprep.subr.bf16.mxu0 0
    %547 = vmatpush1.bf16.msra.mxu0 0
    %548 = vmatprep.subr.bf16.mxu0 0
    %549 = vmatpush1.bf16.msra.mxu0 0
    %550 = vmatprep.subr.bf16.mxu0 0
    %551 = vmatpush1.bf16.msra.mxu0 0
    %552 = vmatprep.subr.bf16.mxu0 0
    %553 = vmatpush1.bf16.msra.mxu0 0
    %554 = vmatprep.subr.bf16.mxu0 0
    %555 = vmatpush1.bf16.msra.mxu0 0
    %556 = vmatprep.subr.bf16.mxu0 0
    %557 = vmatpush1.bf16.msra.mxu0 0
    %558 = vmatprep.mubr.bf16.mxu0 0
    %559 = vmatmul.mubr.bf16.gmra.mrb[0].mxu0 %v266
    %v560 = vpop.f32.mrb[0].mxu0
    %v561 = vadd.f32 %v510, %v560
    %v562 = vpop.f32.mrb[0].mxu0
    %v563 = vpop.f32.mrb[0].mxu0
    %v564 = vadd.f32 %v511, %v563
    %v565 = vpop.f32.mrb[0].mxu0
    %566 = vmatprep.mubr.bf16.mxu0 0
    %567 = vmatmul.mubr.bf16.gmra.mrb[0].mxu0 %v267
    %v568 = vpop.f32.mrb[0].mxu0
    %v569 = vadd.f32 %v512, %v568
    %v570 = vpop.f32.mrb[0].mxu0
    %v571 = vpop.f32.mrb[0].mxu0
    %v572 = vadd.f32 %v513, %v571
    %v573 = vpop.f32.mrb[0].mxu0
    %574 = vmatprep.mubr.bf16.mxu0 0
    %575 = vmatmul.mubr.bf16.gmra.mrb[0].mxu0 %v268
    %v576 = vpop.f32.mrb[0].mxu0
    %v577 = vadd.f32 %v514, %v576
    %v578 = vpop.f32.mrb[0].mxu0
    %v579 = vpop.f32.mrb[0].mxu0
    %v580 = vadd.f32 %v515, %v579
    %v581 = vpop.f32.mrb[0].mxu0
    %582 = vmatprep.mubr.bf16.mxu0 0
    %583 = vmatmul.mubr.bf16.gmra.mrb[0].mxu0 %v269
    %v584 = vpop.f32.mrb[0].mxu0
    %v585 = vadd.f32 %v516, %v584
    %v586 = vpop.f32.mrb[0].mxu0
    %v587 = vpop.f32.mrb[0].mxu0
    %v588 = vadd.f32 %v517, %v587
    %v589 = vpop.f32.mrb[0].mxu0
    %590 = vmatprep.mubr.bf16.mxu0 0
    %591 = vmatmul.mubr.bf16.gmra.mrb[0].mxu0 %v270
    %v592 = vpop.f32.mrb[0].mxu0
    %v593 = vadd.f32 %v518, %v592
    %v594 = vpop.f32.mrb[0].mxu0
    %v595 = vpop.f32.mrb[0].mxu0
    %v596 = vadd.f32 %v519, %v595
    %v597 = vpop.f32.mrb[0].mxu0
    %598 = vmatprep.mubr.bf16.mxu0 0
    %599 = vmatmul.mubr.bf16.gmra.mrb[0].mxu0 %v271
    %v600 = vpop.f32.mrb[0].mxu0
    %v601 = vadd.f32 %v520, %v600
    %v602 = vpop.f32.mrb[0].mxu0
    %v603 = vpop.f32.mrb[0].mxu0
    %v604 = vadd.f32 %v521, %v603
    %v605 = vpop.f32.mrb[0].mxu0
    %606 = vmatprep.mubr.bf16.mxu0 0
    %607 = vmatmul.mubr.bf16.gmra.mrb[0].mxu0 %v272
    %v608 = vpop.f32.mrb[0].mxu0
    %v609 = vadd.f32 %v522, %v608
    %v610 = vpop.f32.mrb[0].mxu0
    %v611 = vpop.f32.mrb[0].mxu0
    %v612 = vadd.f32 %v523, %v611
    %v613 = vpop.f32.mrb[0].mxu0
    %614 = vmatprep.mubr.bf16.mxu0 0
    %615 = vmatmul.mubr.bf16.gmra.mrb[0].mxu0 %v273
    %v616 = vpop.f32.mrb[0].mxu0
    %v617 = vadd.f32 %v524, %v616
    %v618 = vpop.f32.mrb[0].mxu0
    %v619 = vpop.f32.mrb[0].mxu0
    %v620 = vadd.f32 %v525, %v619
    %v621 = vpop.f32.mrb[0].mxu0
    %622 = vdwg.mxu0
    %v623 = vmul.f32 %v250, %v561
    %v624 = vmul.f32 %v251, %v564
    %v625 = vmul.f32 %v252, %v569
    %v626 = vmul.f32 %v253, %v572
    %v627 = vmul.f32 %v254, %v577
    %v628 = vmul.f32 %v255, %v580
    %v629 = vmul.f32 %v256, %v585
    %v630 = vmul.f32 %v257, %v588
    %v631 = vmul.f32 %v258, %v593
    %v632 = vmul.f32 %v259, %v596
    %v633 = vmul.f32 %v260, %v601
    %v634 = vmul.f32 %v261, %v604
    %v635 = vmul.f32 %v262, %v609
    %v636 = vmul.f32 %v263, %v612
    %v637 = vmul.f32 %v264, %v617
    %v638 = vmul.f32 %v265, %v620
    %v639 = vld [vmem:[%s3] sm:$0x1]
    %v641 = vlaneseq
    %v642 = vshrl.u32 %v641, 7
    %v643 = vsub.s32 0, %v642
    %v644 = vrot.slane %v639, %v643
    %v646 = vadd.f32 %v623, %v644
    %v647 = vadd.f32 %v624, %v644
    %v648 = vadd.f32 %v625, %v644
    %v649 = vadd.f32 %v626, %v644
    %v650 = vadd.f32 %v627, %v644
    %v651 = vadd.f32 %v628, %v644
    %v652 = vadd.f32 %v629, %v644
    %v653 = vadd.f32 %v630, %v644
    %v654 = vadd.f32 %v631, %v644
    %v655 = vadd.f32 %v632, %v644
    %v656 = vadd.f32 %v633, %v644
    %v657 = vadd.f32 %v634, %v644
    %v658 = vadd.f32 %v635, %v644
    %v659 = vadd.f32 %v636, %v644
    %v660 = vadd.f32 %v637, %v644
    %v661 = vadd.f32 %v638, %v644
    %v662 = vmax.f32 %v646, 0.0
    %v663 = vmax.f32 %v647, 0.0
    %v664 = vmax.f32 %v648, 0.0
    %v665 = vmax.f32 %v649, 0.0
    %v666 = vmax.f32 %v650, 0.0
    %v667 = vmax.f32 %v651, 0.0
    %v668 = vmax.f32 %v652, 0.0
    %v669 = vmax.f32 %v653, 0.0
    %v670 = vmax.f32 %v654, 0.0
    %v671 = vmax.f32 %v655, 0.0
    %v672 = vmax.f32 %v656, 0.0
    %v673 = vmax.f32 %v657, 0.0
    %v674 = vmax.f32 %v658, 0.0
    %v675 = vmax.f32 %v659, 0.0
    %v676 = vmax.f32 %v660, 0.0
    %v677 = vmax.f32 %v661, 0.0
    %v678 = vld [vmem:[#allocation2] sm:$0xff]
    %v679 = vld [vmem:[#allocation2 + $0x8] sm:$0xff]
    %v680 = vld [vmem:[#allocation2 + $0x10] sm:$0xff]
    %v681 = vld [vmem:[#allocation2 + $0x18] sm:$0xff]
    %v682 = vld [vmem:[#allocation2 + $0x20] sm:$0xff]
    %v683 = vld [vmem:[#allocation2 + $0x28] sm:$0xff]
    %v684 = vld [vmem:[#allocation2 + $0x30] sm:$0xff]
    %v685 = vld [vmem:[#allocation2 + $0x38] sm:$0xff]
    %v686 = vld [vmem:[#allocation2 + $0x40] sm:$0xff]
    %v687 = vld [vmem:[#allocation2 + $0x48] sm:$0xff]
    %v688 = vld [vmem:[#allocation2 + $0x50] sm:$0xff]
    %v689 = vld [vmem:[#allocation2 + $0x58] sm:$0xff]
    %v690 = vld [vmem:[#allocation2 + $0x60] sm:$0xff]
    %v691 = vld [vmem:[#allocation2 + $0x68] sm:$0xff]
    %v692 = vld [vmem:[#allocation2 + $0x70] sm:$0xff]
    %v693 = vld [vmem:[#allocation2 + $0x78] sm:$0xff]
    %694 = vmatprep.subr.mxu0 0.0
    %695 = vmatpush1.msra.mxu0 %v678
    %696 = vmatprep.subr.mxu0 0.0
    %697 = vmatpush1.msra.mxu0 %v679
    %698 = vmatprep.subr.mxu0 0.0
    %699 = vmatpush1.msra.mxu0 %v680
    %700 = vmatprep.subr.mxu0 0.0
    %701 = vmatpush1.msra.mxu0 %v681
    %702 = vmatprep.subr.mxu0 0.0
    %703 = vmatpush1.msra.mxu0 %v682
    %704 = vmatprep.subr.mxu0 0.0
    %705 = vmatpush1.msra.mxu0 %v683
    %706 = vmatprep.subr.mxu0 0.0
    %707 = vmatpush1.msra.mxu0 %v684
    %708 = vmatprep.subr.mxu0 0.0
    %709 = vmatpush1.msra.mxu0 %v685
    %710 = vmatprep.subr.mxu0 0.0
    %711 = vmatpush1.msra.mxu0 %v686
    %712 = vmatprep.subr.mxu0 0.0
    %713 = vmatpush1.msra.mxu0 %v687
    %714 = vmatprep.subr.mxu0 0.0
    %715 = vmatpush1.msra.mxu0 %v688
    %716 = vmatprep.subr.mxu0 0.0
    %717 = vmatpush1.msra.mxu0 %v689
    %718 = vmatprep.subr.mxu0 0.0
    %719 = vmatpush1.msra.mxu0 %v690
    %720 = vmatprep.subr.mxu0 0.0
    %721 = vmatpush1.msra.mxu0 %v691
    %722 = vmatprep.subr.mxu0 0.0
    %723 = vmatpush1.msra.mxu0 %v692
    %724 = vmatprep.subr.mxu0 0.0
    %725 = vmatpush1.msra.mxu0 %v693
    %726 = vmatprep.subr.mxu0 0.0
    %727 = vmatpush1.msra.mxu0 0.0
    %728 = vmatprep.subr.mxu0 0.0
    %729 = vmatpush1.msra.mxu0 0.0
    %730 = vmatprep.subr.mxu0 0.0
    %731 = vmatpush1.msra.mxu0 0.0
    %732 = vmatprep.subr.mxu0 0.0
    %733 = vmatpush1.msra.mxu0 0.0
    %734 = vmatprep.subr.mxu0 0.0
    %735 = vmatpush1.msra.mxu0 0.0
    %736 = vmatprep.subr.mxu0 0.0
    %737 = vmatpush1.msra.mxu0 0.0
    %738 = vmatprep.subr.mxu0 0.0
    %739 = vmatpush1.msra.mxu0 0.0
    %740 = vmatprep.subr.mxu0 0.0
    %741 = vmatpush1.msra.mxu0 0.0
    %742 = vmatprep.subr.mxu0 0.0
    %743 = vmatpush1.msra.mxu0 0.0
    %744 = vmatprep.subr.mxu0 0.0
    %745 = vmatpush1.msra.mxu0 0.0
    %746 = vmatprep.subr.mxu0 0.0
    %747 = vmatpush1.msra.mxu0 0.0
    %748 = vmatprep.subr.mxu0 0.0
    %749 = vmatpush1.msra.mxu0 0.0
    %750 = vmatprep.subr.mxu0 0.0
    %751 = vmatpush1.msra.mxu0 0.0
    %752 = vmatprep.subr.mxu0 0.0
    %753 = vmatpush1.msra.mxu0 0.0
    %754 = vmatprep.subr.mxu0 0.0
    %755 = vmatpush1.msra.mxu0 0.0
    %756 = vmatprep.subr.mxu0 0.0
    %757 = vmatpush1.msra.mxu0 0.0
    %758 = vmatprep.mubr.f32.mxu0 0.0
    %759 = vmatmul.mubr.f32.gmra.mrb[0].mxu0 %v662
    %v760 = vpop.f32.mrb[0].mxu0
    %v761 = vadd.f32 0.0, %v760
    %v762 = vpop.f32.mrb[0].mxu0
    %763 = vmatprep.mubr.f32.mxu0 0.0
    %764 = vmatmul.mubr.f32.gmra.mrb[0].mxu0 %v663
    %v765 = vpop.f32.mrb[0].mxu0
    %v766 = vadd.f32 0.0, %v765
    %v767 = vpop.f32.mrb[0].mxu0
    %768 = vmatprep.mubr.f32.mxu0 0.0
    %769 = vmatmul.mubr.f32.gmra.mrb[0].mxu0 %v664
    %v770 = vpop.f32.mrb[0].mxu0
    %v771 = vadd.f32 0.0, %v770
    %v772 = vpop.f32.mrb[0].mxu0
    %773 = vmatprep.mubr.f32.mxu0 0.0
    %774 = vmatmul.mubr.f32.gmra.mrb[0].mxu0 %v665
    %v775 = vpop.f32.mrb[0].mxu0
    %v776 = vadd.f32 0.0, %v775
    %v777 = vpop.f32.mrb[0].mxu0
    %778 = vmatprep.mubr.f32.mxu0 0.0
    %779 = vmatmul.mubr.f32.gmra.mrb[0].mxu0 %v666
    %v780 = vpop.f32.mrb[0].mxu0
    %v781 = vadd.f32 0.0, %v780
    %v782 = vpop.f32.mrb[0].mxu0
    %783 = vmatprep.mubr.f32.mxu0 0.0
    %784 = vmatmul.mubr.f32.gmra.mrb[0].mxu0 %v667
    %v785 = vpop.f32.mrb[0].mxu0
    %v786 = vadd.f32 0.0, %v785
    %v787 = vpop.f32.mrb[0].mxu0
    %788 = vmatprep.mubr.f32.mxu0 0.0
    %789 = vmatmul.mubr.f32.gmra.mrb[0].mxu0 %v668
    %v790 = vpop.f32.mrb[0].mxu0
    %v791 = vadd.f32 0.0, %v790
    %v792 = vpop.f32.mrb[0].mxu0
    %793 = vmatprep.mubr.f32.mxu0 0.0
    %794 = vmatmul.mubr.f32.gmra.mrb[0].mxu0 %v669
    %v795 = vpop.f32.mrb[0].mxu0
    %v796 = vadd.f32 0.0, %v795
    %v797 = vpop.f32.mrb[0].mxu0
    %798 = vmatprep.mubr.f32.mxu0 0.0
    %799 = vmatmul.mubr.f32.gmra.mrb[0].mxu0 %v670
    %v800 = vpop.f32.mrb[0].mxu0
    %v801 = vadd.f32 0.0, %v800
    %v802 = vpop.f32.mrb[0].mxu0
    %803 = vmatprep.mubr.f32.mxu0 0.0
    %804 = vmatmul.mubr.f32.gmra.mrb[0].mxu0 %v671
    %v805 = vpop.f32.mrb[0].mxu0
    %v806 = vadd.f32 0.0, %v805
    %v807 = vpop.f32.mrb[0].mxu0
    %808 = vmatprep.mubr.f32.mxu0 0.0
    %809 = vmatmul.mubr.f32.gmra.mrb[0].mxu0 %v672
    %v810 = vpop.f32.mrb[0].mxu0
    %v811 = vadd.f32 0.0, %v810
    %v812 = vpop.f32.mrb[0].mxu0
    %813 = vmatprep.mubr.f32.mxu0 0.0
    %814 = vmatmul.mubr.f32.gmra.mrb[0].mxu0 %v673
    %v815 = vpop.f32.mrb[0].mxu0
    %v816 = vadd.f32 0.0, %v815
    %v817 = vpop.f32.mrb[0].mxu0
    %818 = vmatprep.mubr.f32.mxu0 0.0
    %819 = vmatmul.mubr.f32.gmra.mrb[0].mxu0 %v674
    %v820 = vpop.f32.mrb[0].mxu0
    %v821 = vadd.f32 0.0, %v820
    %v822 = vpop.f32.mrb[0].mxu0
    %823 = vmatprep.mubr.f32.mxu0 0.0
    %824 = vmatmul.mubr.f32.gmra.mrb[0].mxu0 %v675
    %v825 = vpop.f32.mrb[0].mxu0
    %v826 = vadd.f32 0.0, %v825
    %v827 = vpop.f32.mrb[0].mxu0
    %828 = vmatprep.mubr.f32.mxu0 0.0
    %829 = vmatmul.mubr.f32.gmra.mrb[0].mxu0 %v676
    %v830 = vpop.f32.mrb[0].mxu0
    %v831 = vadd.f32 0.0, %v830
    %v832 = vpop.f32.mrb[0].mxu0
    %833 = vmatprep.mubr.f32.mxu0 0.0
    %834 = vmatmul.mubr.f32.gmra.mrb[0].mxu0 %v677
    %v835 = vpop.f32.mrb[0].mxu0
    %v836 = vadd.f32 0.0, %v835
    %v837 = vpop.f32.mrb[0].mxu0
    %838 = vdwg.mxu0
    %v839 = vmul.f32 %v250, %v761
    %v840 = vmul.f32 %v251, %v766
    %v841 = vmul.f32 %v252, %v771
    %v842 = vmul.f32 %v253, %v776
    %v843 = vmul.f32 %v254, %v781
    %v844 = vmul.f32 %v255, %v786
    %v845 = vmul.f32 %v256, %v791
    %v846 = vmul.f32 %v257, %v796
    %v847 = vmul.f32 %v258, %v801
    %v848 = vmul.f32 %v259, %v806
    %v849 = vmul.f32 %v260, %v811
    %v850 = vmul.f32 %v261, %v816
    %v851 = vmul.f32 %v262, %v821
    %v852 = vmul.f32 %v263, %v826
    %v853 = vmul.f32 %v264, %v831
    %v854 = vmul.f32 %v265, %v836
    %v855 = vpack.c.bf16 %v840, %v839
    %v856 = vpack.c.bf16 %v842, %v841
    %v857 = vpack.c.bf16 %v844, %v843
    %v858 = vpack.c.bf16 %v846, %v845
    %v859 = vpack.c.bf16 %v848, %v847
    %v860 = vpack.c.bf16 %v850, %v849
    %v861 = vpack.c.bf16 %v852, %v851
    %v862 = vpack.c.bf16 %v854, %v853
    %v863 = vmul.f32 %v154, %v839
    %v864 = vmul.f32 %v155, %v840
    %v865 = vmul.f32 %v156, %v841
    %v866 = vmul.f32 %v157, %v842
    %v867 = vmul.f32 %v158, %v843
    %v868 = vmul.f32 %v159, %v844
    %v869 = vmul.f32 %v160, %v845
    %v870 = vmul.f32 %v161, %v846
    %v871 = vmul.f32 %v162, %v847
    %v872 = vmul.f32 %v163, %v848
    %v873 = vmul.f32 %v164, %v849
    %v874 = vmul.f32 %v165, %v850
    %v875 = vmul.f32 %v166, %v851
    %v876 = vmul.f32 %v167, %v852
    %v877 = vmul.f32 %v168, %v853
    %v878 = vmul.f32 %v169, %v854
    %879 = vmatprep.subr.bf16.mxu0 0
    %880 = vmatpush1.bf16.msra.mxu0 %v855
    %881 = vmatprep.subr.bf16.mxu0 0
    %882 = vmatpush1.bf16.msra.mxu0 %v856
    %883 = vmatprep.subr.bf16.mxu0 0
    %884 = vmatpush1.bf16.msra.mxu0 %v857
    %885 = vmatprep.subr.bf16.mxu0 0
    %886 = vmatpush1.bf16.msra.mxu0 %v858
    %887 = vmatprep.subr.bf16.mxu0 0
    %888 = vmatpush1.bf16.msra.mxu0 %v859
    %889 = vmatprep.subr.bf16.mxu0 0
    %890 = vmatpush1.bf16.msra.mxu0 %v860
    %891 = vmatprep.subr.bf16.mxu0 0
    %892 = vmatpush1.bf16.msra.mxu0 %v861
    %893 = vmatprep.subr.bf16.mxu0 0
    %894 = vmatpush1.bf16.msra.mxu0 %v862
    %895 = vmatprep.subr.bf16.mxu0 0
    %896 = vmatpush1.bf16.msra.mxu0 0
    %897 = vmatprep.subr.bf16.mxu0 0
    %898 = vmatpush1.bf16.msra.mxu0 0
    %899 = vmatprep.subr.bf16.mxu0 0
    %900 = vmatpush1.bf16.msra.mxu0 0
    %901 = vmatprep.subr.bf16.mxu0 0
    %902 = vmatpush1.bf16.msra.mxu0 0
    %903 = vmatprep.subr.bf16.mxu0 0
    %904 = vmatpush1.bf16.msra.mxu0 0
    %905 = vmatprep.subr.bf16.mxu0 0
    %906 = vmatpush1.bf16.msra.mxu0 0
    %907 = vmatprep.subr.bf16.mxu0 0
    %908 = vmatpush1.bf16.msra.mxu0 0
    %909 = vmatprep.subr.bf16.mxu0 0
    %910 = vmatpush1.bf16.msra.mxu0 0
    %911 = vmatprep.mubr.bf16.mxu0 0
    %912 = vmatmul.mubr.bf16.gmra.mrb[0].mxu0 %v266
    %v913 = vpop.f32.mrb[0].mxu0
    %v914 = vadd.f32 %v863, %v913
    %v915 = vpop.f32.mrb[0].mxu0
    %v916 = vpop.f32.mrb[0].mxu0
    %v917 = vadd.f32 %v864, %v916
    %v918 = vpop.f32.mrb[0].mxu0
    %919 = vmatprep.mubr.bf16.mxu0 0
    %920 = vmatmul.mubr.bf16.gmra.mrb[0].mxu0 %v267
    %v921 = vpop.f32.mrb[0].mxu0
    %v922 = vadd.f32 %v865, %v921
    %v923 = vpop.f32.mrb[0].mxu0
    %v924 = vpop.f32.mrb[0].mxu0
    %v925 = vadd.f32 %v866, %v924
    %v926 = vpop.f32.mrb[0].mxu0
    %927 = vmatprep.mubr.bf16.mxu0 0
    %928 = vmatmul.mubr.bf16.gmra.mrb[0].mxu0 %v268
    %v929 = vpop.f32.mrb[0].mxu0
    %v930 = vadd.f32 %v867, %v929
    %v931 = vpop.f32.mrb[0].mxu0
    %v932 = vpop.f32.mrb[0].mxu0
    %v933 = vadd.f32 %v868, %v932
    %v934 = vpop.f32.mrb[0].mxu0
    %935 = vmatprep.mubr.bf16.mxu0 0
    %936 = vmatmul.mubr.bf16.gmra.mrb[0].mxu0 %v269
    %v937 = vpop.f32.mrb[0].mxu0
    %v938 = vadd.f32 %v869, %v937
    %v939 = vpop.f32.mrb[0].mxu0
    %v940 = vpop.f32.mrb[0].mxu0
    %v941 = vadd.f32 %v870, %v940
    %v942 = vpop.f32.mrb[0].mxu0
    %943 = vmatprep.mubr.bf16.mxu0 0
    %944 = vmatmul.mubr.bf16.gmra.mrb[0].mxu0 %v270
    %v945 = vpop.f32.mrb[0].mxu0
    %v946 = vadd.f32 %v871, %v945
    %v947 = vpop.f32.mrb[0].mxu0
    %v948 = vpop.f32.mrb[0].mxu0
    %v949 = vadd.f32 %v872, %v948
    %v950 = vpop.f32.mrb[0].mxu0
    %951 = vmatprep.mubr.bf16.mxu0 0
    %952 = vmatmul.mubr.bf16.gmra.mrb[0].mxu0 %v271
    %v953 = vpop.f32.mrb[0].mxu0
    %v954 = vadd.f32 %v873, %v953
    %v955 = vpop.f32.mrb[0].mxu0
    %v956 = vpop.f32.mrb[0].mxu0
    %v957 = vadd.f32 %v874, %v956
    %v958 = vpop.f32.mrb[0].mxu0
    %959 = vmatprep.mubr.bf16.mxu0 0
    %960 = vmatmul.mubr.bf16.gmra.mrb[0].mxu0 %v272
    %v961 = vpop.f32.mrb[0].mxu0
    %v962 = vadd.f32 %v875, %v961
    %v963 = vpop.f32.mrb[0].mxu0
    %v964 = vpop.f32.mrb[0].mxu0
    %v965 = vadd.f32 %v876, %v964
    %v966 = vpop.f32.mrb[0].mxu0
    %967 = vmatprep.mubr.bf16.mxu0 0
    %968 = vmatmul.mubr.bf16.gmra.mrb[0].mxu0 %v273
    %v969 = vpop.f32.mrb[0].mxu0
    %v970 = vadd.f32 %v877, %v969
    %v971 = vpop.f32.mrb[0].mxu0
    %v972 = vpop.f32.mrb[0].mxu0
    %v973 = vadd.f32 %v878, %v972
    %v974 = vpop.f32.mrb[0].mxu0
    %975 = vdwg.mxu0
    %v976 = vmul.f32 %v250, %v914
    %v977 = vmul.f32 %v251, %v917
    %v978 = vmul.f32 %v252, %v922
    %v979 = vmul.f32 %v253, %v925
    %v980 = vmul.f32 %v254, %v930
    %v981 = vmul.f32 %v255, %v933
    %v982 = vmul.f32 %v256, %v938
    %v983 = vmul.f32 %v257, %v941
    %v984 = vmul.f32 %v258, %v946
    %v985 = vmul.f32 %v259, %v949
    %v986 = vmul.f32 %v260, %v954
    %v987 = vmul.f32 %v261, %v957
    %v988 = vmul.f32 %v262, %v962
    %v989 = vmul.f32 %v263, %v965
    %v990 = vmul.f32 %v264, %v970
    %v991 = vmul.f32 %v265, %v973
    %v992 = vld [vmem:[%s5] sm:$0x1]
    %v994 = vlaneseq
    %v995 = vshrl.u32 %v994, 7
    %v996 = vsub.s32 0, %v995
    %v997 = vrot.slane %v992, %v996
    %v999 = vadd.f32 %v976, %v997
    %v1000 = vadd.f32 %v977, %v997
    %v1001 = vadd.f32 %v978, %v997
    %v1002 = vadd.f32 %v979, %v997
    %v1003 = vadd.f32 %v980, %v997
    %v1004 = vadd.f32 %v981, %v997
    %v1005 = vadd.f32 %v982, %v997
    %v1006 = vadd.f32 %v983, %v997
    %v1007 = vadd.f32 %v984, %v997
    %v1008 = vadd.f32 %v985, %v997
    %v1009 = vadd.f32 %v986, %v997
    %v1010 = vadd.f32 %v987, %v997
    %v1011 = vadd.f32 %v988, %v997
    %v1012 = vadd.f32 %v989, %v997
    %v1013 = vadd.f32 %v990, %v997
    %v1014 = vadd.f32 %v991, %v997
    %v1015 = vmul.f32 %v999, 5.0
    %v1016 = vmul.f32 %v1000, 5.0
    %v1017 = vmul.f32 %v1001, 5.0
    %v1018 = vmul.f32 %v1002, 5.0
    %v1019 = vmul.f32 %v1003, 5.0
    %v1020 = vmul.f32 %v1004, 5.0
    %v1021 = vmul.f32 %v1005, 5.0
    %v1022 = vmul.f32 %v1006, 5.0
    %v1023 = vmul.f32 %v1007, 5.0
    %v1024 = vmul.f32 %v1008, 5.0
    %v1025 = vmul.f32 %v1009, 5.0
    %v1026 = vmul.f32 %v1010, 5.0
    %v1027 = vmul.f32 %v1011, 5.0
    %v1028 = vmul.f32 %v1012, 5.0
    %v1029 = vmul.f32 %v1013, 5.0
    %v1030 = vmul.f32 %v1014, 5.0
    %vm1031 = vcmp.lt.s32.totalorder %v73, 8
    %v1032 = vsel %vm1031, %v1015, -inf
    %v1033 = vsel %vm1031, %v1016, -inf
    %v1034 = vsel %vm1031, %v1017, -inf
    %v1035 = vsel %vm1031, %v1018, -inf
    %v1036 = vsel %vm1031, %v1019, -inf
    %v1037 = vsel %vm1031, %v1020, -inf
    %v1038 = vsel %vm1031, %v1021, -inf
    %v1039 = vsel %vm1031, %v1022, -inf
    %v1040 = vsel %vm1031, %v1023, -inf
    %v1041 = vsel %vm1031, %v1024, -inf
    %v1042 = vsel %vm1031, %v1025, -inf
    %v1043 = vsel %vm1031, %v1026, -inf
    %v1044 = vsel %vm1031, %v1027, -inf
    %v1045 = vsel %vm1031, %v1028, -inf
    %v1046 = vsel %vm1031, %v1029, -inf
    %v1047 = vsel %vm1031, %v1030, -inf
    %1048 = vmax.xlane.f32.xlu0 %v1032
    %v1049 = vpop.xlane.xlu0 %1048
    %1050 = vmax.xlane.f32.xlu0 %v1033
    %v1051 = vpop.xlane.xlu0 %1050
    %1052 = vmax.xlane.f32.xlu0 %v1034
    %v1053 = vpop.xlane.xlu0 %1052
    %1054 = vmax.xlane.f32.xlu0 %v1035
    %v1055 = vpop.xlane.xlu0 %1054
    %1056 = vmax.xlane.f32.xlu0 %v1036
    %v1057 = vpop.xlane.xlu0 %1056
    %1058 = vmax.xlane.f32.xlu0 %v1037
    %v1059 = vpop.xlane.xlu0 %1058
    %1060 = vmax.xlane.f32.xlu0 %v1038
    %v1061 = vpop.xlane.xlu0 %1060
    %1062 = vmax.xlane.f32.xlu0 %v1039
    %v1063 = vpop.xlane.xlu0 %1062
    %1064 = vmax.xlane.f32.xlu0 %v1040
    %v1065 = vpop.xlane.xlu0 %1064
    %1066 = vmax.xlane.f32.xlu0 %v1041
    %v1067 = vpop.xlane.xlu0 %1066
    %1068 = vmax.xlane.f32.xlu0 %v1042
    %v1069 = vpop.xlane.xlu0 %1068
    %1070 = vmax.xlane.f32.xlu0 %v1043
    %v1071 = vpop.xlane.xlu0 %1070
    %1072 = vmax.xlane.f32.xlu0 %v1044
    %v1073 = vpop.xlane.xlu0 %1072
    %1074 = vmax.xlane.f32.xlu0 %v1045
    %v1075 = vpop.xlane.xlu0 %1074
    %1076 = vmax.xlane.f32.xlu0 %v1046
    %v1077 = vpop.xlane.xlu0 %1076
    %1078 = vmax.xlane.f32.xlu0 %v1047
    %v1079 = vpop.xlane.xlu0 %1078
    %v1080 = vsub.f32 %v1032, %v1049
    %v1081 = vsub.f32 %v1033, %v1051
    %v1082 = vsub.f32 %v1034, %v1053
    %v1083 = vsub.f32 %v1035, %v1055
    %v1084 = vsub.f32 %v1036, %v1057
    %v1085 = vsub.f32 %v1037, %v1059
    %v1086 = vsub.f32 %v1038, %v1061
    %v1087 = vsub.f32 %v1039, %v1063
    %v1088 = vsub.f32 %v1040, %v1065
    %v1089 = vsub.f32 %v1041, %v1067
    %v1090 = vsub.f32 %v1042, %v1069
    %v1091 = vsub.f32 %v1043, %v1071
    %v1092 = vsub.f32 %v1044, %v1073
    %v1093 = vsub.f32 %v1045, %v1075
    %v1094 = vsub.f32 %v1046, %v1077
    %v1095 = vsub.f32 %v1047, %v1079
    %v1096 = vmul.f32 %v1080, 1.442695
    %v1097 = vpow.pop %v1096
    %v1098 = vmul.f32 %v1081, 1.442695
    %v1099 = vpow.pop %v1098
    %v1100 = vmul.f32 %v1082, 1.442695
    %v1101 = vpow.pop %v1100
    %v1102 = vmul.f32 %v1083, 1.442695
    %v1103 = vpow.pop %v1102
    %v1104 = vmul.f32 %v1084, 1.442695
    %v1105 = vpow.pop %v1104
    %v1106 = vmul.f32 %v1085, 1.442695
    %v1107 = vpow.pop %v1106
    %v1108 = vmul.f32 %v1086, 1.442695
    %v1109 = vpow.pop %v1108
    %v1110 = vmul.f32 %v1087, 1.442695
    %v1111 = vpow.pop %v1110
    %v1112 = vmul.f32 %v1088, 1.442695
    %v1113 = vpow.pop %v1112
    %v1114 = vmul.f32 %v1089, 1.442695
    %v1115 = vpow.pop %v1114
    %v1116 = vmul.f32 %v1090, 1.442695
    %v1117 = vpow.pop %v1116
    %v1118 = vmul.f32 %v1091, 1.442695
    %v1119 = vpow.pop %v1118
    %v1120 = vmul.f32 %v1092, 1.442695
    %v1121 = vpow.pop %v1120
    %v1122 = vmul.f32 %v1093, 1.442695
    %v1123 = vpow.pop %v1122
    %v1124 = vmul.f32 %v1094, 1.442695
    %v1125 = vpow.pop %v1124
    %v1126 = vmul.f32 %v1095, 1.442695
    %v1127 = vpow.pop %v1126
    %1128 = vadd.xlane.f32.xlu0 %v1097
    %v1129 = vpop.xlane.xlu0 %1128
    %1130 = vadd.xlane.f32.xlu0 %v1099
    %v1131 = vpop.xlane.xlu0 %1130
    %1132 = vadd.xlane.f32.xlu0 %v1101
    %v1133 = vpop.xlane.xlu0 %1132
    %1134 = vadd.xlane.f32.xlu0 %v1103
    %v1135 = vpop.xlane.xlu0 %1134
    %1136 = vadd.xlane.f32.xlu0 %v1105
    %v1137 = vpop.xlane.xlu0 %1136
    %1138 = vadd.xlane.f32.xlu0 %v1107
    %v1139 = vpop.xlane.xlu0 %1138
    %1140 = vadd.xlane.f32.xlu0 %v1109
    %v1141 = vpop.xlane.xlu0 %1140
    %1142 = vadd.xlane.f32.xlu0 %v1111
    %v1143 = vpop.xlane.xlu0 %1142
    %1144 = vadd.xlane.f32.xlu0 %v1113
    %v1145 = vpop.xlane.xlu0 %1144
    %1146 = vadd.xlane.f32.xlu0 %v1115
    %v1147 = vpop.xlane.xlu0 %1146
    %1148 = vadd.xlane.f32.xlu0 %v1117
    %v1149 = vpop.xlane.xlu0 %1148
    %1150 = vadd.xlane.f32.xlu0 %v1119
    %v1151 = vpop.xlane.xlu0 %1150
    %1152 = vadd.xlane.f32.xlu0 %v1121
    %v1153 = vpop.xlane.xlu0 %1152
    %1154 = vadd.xlane.f32.xlu0 %v1123
    %v1155 = vpop.xlane.xlu0 %1154
    %1156 = vadd.xlane.f32.xlu0 %v1125
    %v1157 = vpop.xlane.xlu0 %1156
    %1158 = vadd.xlane.f32.xlu0 %v1127
    %v1159 = vpop.xlane.xlu0 %1158
    %v1160 = vlog2.pop %v1129
    %v1161 = vmul.f32 %v1160, 0.6931472
    %v1162 = vlog2.pop %v1131
    %v1163 = vmul.f32 %v1162, 0.6931472
    %v1164 = vlog2.pop %v1133
    %v1165 = vmul.f32 %v1164, 0.6931472
    %v1166 = vlog2.pop %v1135
    %v1167 = vmul.f32 %v1166, 0.6931472
    %v1168 = vlog2.pop %v1137
    %v1169 = vmul.f32 %v1168, 0.6931472
    %v1170 = vlog2.pop %v1139
    %v1171 = vmul.f32 %v1170, 0.6931472
    %v1172 = vlog2.pop %v1141
    %v1173 = vmul.f32 %v1172, 0.6931472
    %v1174 = vlog2.pop %v1143
    %v1175 = vmul.f32 %v1174, 0.6931472
    %v1176 = vlog2.pop %v1145
    %v1177 = vmul.f32 %v1176, 0.6931472
    %v1178 = vlog2.pop %v1147
    %v1179 = vmul.f32 %v1178, 0.6931472
    %v1180 = vlog2.pop %v1149
    %v1181 = vmul.f32 %v1180, 0.6931472
    %v1182 = vlog2.pop %v1151
    %v1183 = vmul.f32 %v1182, 0.6931472
    %v1184 = vlog2.pop %v1153
    %v1185 = vmul.f32 %v1184, 0.6931472
    %v1186 = vlog2.pop %v1155
    %v1187 = vmul.f32 %v1186, 0.6931472
    %v1188 = vlog2.pop %v1157
    %v1189 = vmul.f32 %v1188, 0.6931472
    %v1190 = vlog2.pop %v1159
    %v1191 = vmul.f32 %v1190, 0.6931472
    %v1192 = vsub.f32 %v1080, %v1161
    %v1193 = vsub.f32 %v1081, %v1163
    %v1194 = vsub.f32 %v1082, %v1165
    %v1195 = vsub.f32 %v1083, %v1167
    %v1196 = vsub.f32 %v1084, %v1169
    %v1197 = vsub.f32 %v1085, %v1171
    %v1198 = vsub.f32 %v1086, %v1173
    %v1199 = vsub.f32 %v1087, %v1175
    %v1200 = vsub.f32 %v1088, %v1177
    %v1201 = vsub.f32 %v1089, %v1179
    %v1202 = vsub.f32 %v1090, %v1181
    %v1203 = vsub.f32 %v1091, %v1183
    %v1204 = vsub.f32 %v1092, %v1185
    %v1205 = vsub.f32 %v1093, %v1187
    %v1206 = vsub.f32 %v1094, %v1189
    %v1207 = vsub.f32 %v1095, %v1191
    %1208 = vst [vmem:[#allocation5] sm:$0xff] %v1192
    %1209 = vst [vmem:[#allocation5 + $0x8] sm:$0xff] %v1193
    %1210 = vst [vmem:[#allocation5 + $0x10] sm:$0xff] %v1194
    %1211 = vst [vmem:[#allocation5 + $0x18] sm:$0xff] %v1195
    %1212 = vst [vmem:[#allocation5 + $0x20] sm:$0xff] %v1196
    %1213 = vst [vmem:[#allocation5 + $0x28] sm:$0xff] %v1197
    %1214 = vst [vmem:[#allocation5 + $0x30] sm:$0xff] %v1198
    %1215 = vst [vmem:[#allocation5 + $0x38] sm:$0xff] %v1199
    %1216 = vst [vmem:[#allocation5 + $0x40] sm:$0xff] %v1200
    %1217 = vst [vmem:[#allocation5 + $0x48] sm:$0xff] %v1201
    %1218 = vst [vmem:[#allocation5 + $0x50] sm:$0xff] %v1202
    %1219 = vst [vmem:[#allocation5 + $0x58] sm:$0xff] %v1203
    %1220 = vst [vmem:[#allocation5 + $0x60] sm:$0xff] %v1204
    %1221 = vst [vmem:[#allocation5 + $0x68] sm:$0xff] %v1205
    %1222 = vst [vmem:[#allocation5 + $0x70] sm:$0xff] %v1206
    %1223 = vst [vmem:[#allocation5 + $0x78] sm:$0xff] %v1207
    // Predicated region
    $region30: #{tpu_custom_call.1} parent=1 // pred_check
      _
    $region31: #{tpu_custom_call.1} parent=1 // pred_check_branch
      %1225 = sbr.rel (0) target = $region33
    $region32: #{tpu_custom_call.1} parent=1 // pred_region
      %s1227 = ssub.s32 2048, 2048
      %1228 = vsyncadd [#allocation4], %s1227
      %s1229 = sshll.u32 [#allocation5], 4
      %s1230 = int_to_ptr.vmem [resolvable:$true] %s1229
      %1235 = dma.vmem_to_hbm [thread:$0]  %s1230, 2048, %s6, [#allocation4], 128, 128, 8
    $region33: #{tpu_custom_call.1} parent=1 // pred_fallthru
      _
    // Predicated region
    $region34: #{tpu_custom_call.1} parent=1 // pred_check
      _
    $region35: #{tpu_custom_call.1} parent=1 // pred_check_branch
      %1237 = sbr.rel (0) target = $region37
    $region36: #{tpu_custom_call.1} parent=1 // pred_region
      %1238 = dma.done [#allocation4], 2048
    $region37: #{tpu_custom_call.1} parent=1 // pred_fallthru
      _
    %1239 = vsyncpa [#allocation3], 1
    %1240 = vsyncpa [#allocation4], 1

</llo_original>
